<compile_context>
chip_gen: v7x
topology: tpu7x:2x2x1
jax: 0.10.0
libtpu: 0.0.40
codegen_flags: <defaults>
</compile_context>

<pallas_src>
import functools

import jax
import jax.numpy as jnp
from jax import lax
from jax.experimental import pallas as pl
from jax.experimental.pallas import tpu as pltpu


def _round_up(x, m):
    return ((x + m - 1) // m) * m


# ----------------------------------------------------------------------------
# Pallas kernel: hops loop + GRU cell + dense head for one batch tile
# ----------------------------------------------------------------------------
def ram_hops_kernel(mem_ref,            # [TB, L, Mp]  bf16/f32 (locationed memory)
                    g_const_ref,        # [TB, L]      f32 (hop-invariant logits, masked)
                    w_e_ref,            # [1, Dp]      f32
                    w_ih_ref,           # [Mp, 3*Dp]   bf16/f32  (r|z|n)
                    w_hh_ref,           # [Dp, 3*Dp]   bf16/f32  (r|z|n)
                    gru_b_ref,          # [4, Dp]      f32 (b_r, b_z, b_in, b_hn)
                    w_d_ref,            # [Dp, P_pad]  bf16/f32
                    b_d_ref,            # [1, P_pad]   f32
                    out_ref,            # [TB, P_pad]  f32
                    *, hops, mxu_dtype):
    TB, L, Mp = mem_ref.shape
    Dp = w_hh_ref.shape[0]

    def mm(a, b):                       # 2-D matmul on the MXU, f32 accumulate
        if mxu_dtype is not None:
            a = a.astype(mxu_dtype)
            b = b.astype(mxu_dtype)
        return jnp.dot(a, b, preferred_element_type=jnp.float32)

    g_const = g_const_ref[...]                              # [TB, L] f32
    w_e = w_e_ref[...]                                      # [1, Dp] f32
    w_ih = w_ih_ref[...]                                    # [Mp, 3Dp]
    w_hh = w_hh_ref[...]                                    # [Dp, 3Dp]
    gb = gru_b_ref[...]                                     # [4, Dp] f32
    b_r, b_z = gb[0:1, :], gb[1:2, :]
    b_in, b_hn = gb[2:3, :], gb[3:4, :]

    LC = 8  # sublane-sized chunk for the VPU readout

    # TODO(synk): the reference casts memory to float64 between hops; TPU has no
    # f64 vector path, so all hop math runs in float32 (bf16 memory stream).
    et = jnp.zeros((TB, Dp), jnp.float32)
    for hop in range(hops):
        # hop-varying logit term: et . w_e as a VPU multiply + lane reduce
        g_et = jnp.sum(et * w_e, axis=-1, keepdims=True)    # [TB, 1]
        g = g_const + g_et                                  # [TB, L]
        g = g - jnp.max(g, axis=-1, keepdims=True)
        eg = jnp.exp(g)
        denom = jnp.sum(eg, axis=-1, keepdims=True)
        if hop + 1 == hops:
            alpha = eg / denom                              # exact on final hop
        else:
            alpha = eg * pl.reciprocal(denom, approx=True)  # EUP slot

        # weighted readout i = alpha^T @ memory as a VPU multiply + sublane
        # reduce (chunked over L), keeping the MXU free for the GRU matmuls.
        i_vec = jnp.zeros((TB, Mp), jnp.float32)
        for l0 in range(0, L, LC):
            lc = min(LC, L - l0)
            m_c = mem_ref[:, l0:l0 + lc, :].astype(jnp.float32)   # [TB, lc, Mp]
            a_c = alpha[:, l0:l0 + lc]                            # [TB, lc]
            i_vec = i_vec + jnp.sum(a_c[:, :, None] * m_c, axis=1)

        # fused GRU gate matmuls; gate slices are lane-aligned at multiples of Dp
        gi = mm(i_vec, w_ih)                                # [TB, 3Dp] f32
        gh = mm(et, w_hh)                                   # [TB, 3Dp] f32
        r = jax.nn.sigmoid(gi[:, :Dp] + gh[:, :Dp] + b_r)
        z = jax.nn.sigmoid(gi[:, Dp:2 * Dp] + gh[:, Dp:2 * Dp] + b_z)
        n = jnp.tanh(gi[:, 2 * Dp:] + b_in + r * (gh[:, 2 * Dp:] + b_hn))
        et = (1.0 - z) * n + z * et

    # Dense head: lane-dense (P padded to 128 lanes), sliced by the wrapper.
    out_ref[...] = mm(et, w_d_ref[...]) + b_d_ref[...]


# ----------------------------------------------------------------------------
# VMEM-aware tiling helpers
# ----------------------------------------------------------------------------
def _vmem_capacity_bytes():
    try:
        return int(pltpu.get_tpu_info().vmem_capacity_bytes)
    except Exception:
        return 64 << 20          # v7x-safe fallback


def _vmem_limit_bytes():
    cap = _vmem_capacity_bytes()
    # Raise the scoped-VMEM limit well past the 16/32 MiB defaults, but leave
    # headroom below the physical capacity (v7x: 64 MiB, v5e/v6e: 128 MiB).
    return int(min(cap - (16 << 20), 100 << 20))


def _pick_batch_tile(B, L, Mp, mem_itemsize, target=256):
    cap = _vmem_capacity_bytes()
    # ~35% of VMEM for the double-buffered [TB, L, Mp] memory tile; the rest is
    # for resident weights, g_const/out tiles, and hop-loop temporaries.
    budget = int(cap * 0.35)
    per_row = 2 * L * Mp * mem_itemsize
    tb = min(target, max(1, budget // max(per_row, 1)))
    if B >= 16:
        tb = min(tb, (B + 1) // 2)          # grid >= 2 steps: keep both v7x TCs busy
    tb = max(8, min(_round_up(tb, 8), _round_up(B, 8)))     # sublane-aligned tile
    return int(tb)


# ----------------------------------------------------------------------------
# Wrapper: weight packing/padding + pallas_call
# ----------------------------------------------------------------------------
def ram_hops_pallas(memory, aspect, memory_len, params, hops, *,
                    batch_tile=None, mxu_dtype=jnp.bfloat16):
    B, L, M = memory.shape
    D = aspect.shape[1]
    P = params["w_dense"].shape[1]

    Mp = _round_up(M, 128)
    Dp = _round_up(D, 128)
    P_pad = _round_up(P, 128)

    wdt = mxu_dtype if mxu_dtype is not None else jnp.float32      # MXU weight dtype
    mdt = mxu_dtype if mxu_dtype is not None else jnp.float32      # memory stream dtype
    m_item = jnp.dtype(mdt).itemsize

    TB = batch_tile if batch_tile is not None else _pick_batch_tile(B, L, Mp, m_item)
    B_pad = _round_up(B, TB)

    # --- attention weights -------------------------------------------------
    w_att = params["w_att"]                                 # [M + 2D, 1]
    w_m_col = w_att[:M]                                     # [M, 1]
    w_e_col = w_att[M:M + D]                                # [D, 1]
    w_a_col = w_att[M + D:]                                 # [D, 1]

    # hop-invariant logits (memory.w_m + aspect.w_a + b_att), computed once in
    # f32 in the wrapper, with the batch-max-length mask folded in (matches the
    # squeeze_embedding truncation of the reference).
    g_mem = (memory.reshape(B * L, M) @ w_m_col).reshape(B, L)
    g_bias = aspect @ w_a_col + params["b_att"]             # [B, 1]
    g_const = (g_mem + g_bias).astype(jnp.float32)
    valid = jnp.arange(L)[None, :] < jnp.max(memory_len)
    g_const = jnp.where(valid, g_const, jnp.float32(-1e30))

    w_e_row = jnp.zeros((1, Dp), jnp.float32).at[0, :D].set(w_e_col[:, 0])

    # --- fused, lane-padded GRU weights (gate order r|z|n) -------------------
    w_ih, w_hh = params["gru_w_ih"], params["gru_w_hh"]     # [M, 3D], [D, 3D]
    b_ih, b_hh = params["gru_b_ih"], params["gru_b_hh"]     # [1, 3D]
    w_ih_f = jnp.zeros((Mp, 3 * Dp), jnp.float32)
    w_hh_f = jnp.zeros((Dp, 3 * Dp), jnp.float32)
    for k in range(3):
        w_ih_f = w_ih_f.at[:M, k * Dp:k * Dp + D].set(w_ih[:, k * D:(k + 1) * D])
        w_hh_f = w_hh_f.at[:D, k * Dp:k * Dp + D].set(w_hh[:, k * D:(k + 1) * D])
    gbias = jnp.zeros((4, Dp), jnp.float32)
    gbias = gbias.at[0, :D].set(b_ih[0, :D] + b_hh[0, :D])              # b_r
    gbias = gbias.at[1, :D].set(b_ih[0, D:2 * D] + b_hh[0, D:2 * D])    # b_z
    gbias = gbias.at[2, :D].set(b_ih[0, 2 * D:])                        # b_in
    gbias = gbias.at[3, :D].set(b_hh[0, 2 * D:])                        # b_hn

    # --- lane-dense dense head ----------------------------------------------
    w_d_p = jnp.zeros((Dp, P_pad), jnp.float32).at[:D, :P].set(params["w_dense"])
    b_d_p = jnp.zeros((1, P_pad), jnp.float32).at[0, :P].set(params["b_dense"][0])

    # --- batch / feature padding (zero-padded rows are sliced off at the end) --
    mem_p = jnp.zeros((B_pad, L, Mp), mdt).at[:B, :, :M].set(memory.astype(mdt))
    g_const_p = jnp.zeros((B_pad, L), jnp.float32).at[:B].set(g_const)

    weights = [w_e_row,
               w_ih_f.astype(wdt), w_hh_f.astype(wdt),
               gbias,
               w_d_p.astype(wdt), b_d_p]

    def full_spec(a):                   # hop-invariant weights, fetched once
        return pl.BlockSpec(a.shape, lambda b: (0, 0))

    grid_spec = pltpu.PrefetchScalarGridSpec(
        num_scalar_prefetch=0,
        grid=(B_pad // TB,),
        in_specs=[pl.BlockSpec((TB, L, Mp), lambda b: (b, 0, 0)),
                  pl.BlockSpec((TB, L), lambda b: (b, 0))]
                 + [full_spec(w) for w in weights],
        out_specs=pl.BlockSpec((TB, P_pad), lambda b: (b, 0)),
    )

    kernel = functools.partial(ram_hops_kernel, hops=hops, mxu_dtype=mxu_dtype)
    out = pl.pallas_call(
        kernel,
        out_shape=jax.ShapeDtypeStruct((B_pad, P_pad), jnp.float32),
        grid_spec=grid_spec,
        compiler_params=pltpu.CompilerParams(
            dimension_semantics=("parallel",),
            vmem_limit_bytes=_vmem_limit_bytes()),
    )(mem_p, g_const_p, *weights)
    return out[:B, :P]


# ----------------------------------------------------------------------------
# Plain-JAX glue (embedding stand-in, masked BiLSTM, locationed memory, pooling)
# ----------------------------------------------------------------------------
def _lstm_scan(x, mask, w_ih, w_hh, b_ih, b_hh, H):
    # x: [B, T, D], mask: [B, T] (1.0 at valid positions); PyTorch gate order i,f,g,o.
    # Emulates packed sequences: padded steps keep the previous carry and emit
    # zero outputs, so the backward direction starts at the last valid token.
    B = x.shape[0]

    def step(carry, inp):
        xt, mt = inp                           # [B, D], [B, 1]
        h, c = carry
        gates = xt @ w_ih.T + b_ih + h @ w_hh.T + b_hh
        i, f, g, o = jnp.split(gates, 4, axis=-1)
        i, f, o = jax.nn.sigmoid(i), jax.nn.sigmoid(f), jax.nn.sigmoid(o)
        g = jnp.tanh(g)
        c_new = f * c + i * g
        h_new = o * jnp.tanh(c_new)
        h = jnp.where(mt > 0, h_new, h)
        c = jnp.where(mt > 0, c_new, c)
        return (h, c), h * mt

    init = (jnp.zeros((B, H), jnp.float32), jnp.zeros((B, H), jnp.float32))
    xs = (jnp.transpose(x, (1, 0, 2)), jnp.transpose(mask, (1, 0))[:, :, None])
    _, hs = lax.scan(step, init, xs)
    return jnp.transpose(hs, (1, 0, 2))


def locationed_memory(memory, memory_len, left_len, aspect_len):
    B, L, _ = memory.shape
    idx = jnp.arange(L, dtype=jnp.float32)[None, :]
    ll = left_len.astype(jnp.float32)[:, None]
    al = aspect_len.astype(jnp.float32)[:, None]
    ml = jnp.maximum(memory_len, 1).astype(jnp.float32)[:, None]

    weight = jnp.where(idx < ll, 1.0 - (ll - idx) / ml,
             jnp.where(idx < ll + al, 1.0,
             jnp.where(idx < ml, 1.0 - (idx - ll - al + 1.0) / ml, 1.0)))
    u = jnp.where(idx < ll, idx - ll,
        jnp.where(idx < ll + al, 0.0,
        jnp.where(idx < ml, idx - ll - al + 1.0, 0.0)))

    v = memory * weight[:, :, None]
    return jnp.concatenate([v, u[:, :, None]], axis=2)          # [B, L, 2H+1]


def ram_forward(text_raw, aspect_idx, text_left, params, hops, hidden_dim):
    memory_len = jnp.sum(text_raw != 0, axis=-1)
    left_len = jnp.sum(text_left != 0, axis=-1)
    aspect_len = jnp.sum(aspect_idx != 0, axis=-1)
    B, L = text_raw.shape
    A = aspect_idx.shape[1]

    # TODO(synk): BERT encoder (sum of last 4 hidden layers) replaced by a
    # deterministic embedding-table lookup; dropout is identity (eval mode).
    context = params["emb"][text_raw]                           # [B, L, D]

    # masked bidirectional LSTM (DynamicLSTM / packed-sequence behavior)
    ctx_mask = (jnp.arange(L)[None, :] < memory_len[:, None]).astype(jnp.float32)
    h_f = _lstm_scan(context, ctx_mask,
                     params["lstm_f_w_ih"], params["lstm_f_w_hh"],
                     params["lstm_f_b_ih"], params["lstm_f_b_hh"], hidden_dim)
    h_b = _lstm_scan(context[:, ::-1], ctx_mask[:, ::-1],
                     params["lstm_b_w_ih"], params["lstm_b_w_hh"],
                     params["lstm_b_b_ih"], params["lstm_b_b_hh"], hidden_dim)[:, ::-1]
    mem2h = jnp.concatenate([h_f, h_b], axis=-1)                # [B, L, 2H]

    memory = locationed_memory(mem2h, memory_len, left_len, aspect_len)

    # aspect branch: batch-max truncation via on-device mask (no host sync),
    # mean over the number of valid aspect tokens (guarded against zero).
    a_mask = (jnp.arange(A)[None, :] < jnp.max(aspect_len)).astype(jnp.float32)
    asp_emb = params["emb"][aspect_idx] * a_mask[:, :, None]
    aspect = jnp.sum(asp_emb, axis=1) / \
        jnp.maximum(aspect_len, 1).astype(jnp.float32)[:, None]

    return ram_hops_pallas(memory.astype(jnp.float32), aspect.astype(jnp.float32),
                           memory_len, params, hops)


# ----------------------------------------------------------------------------
# Deterministic parameter initialization
# ----------------------------------------------------------------------------
def init_params(key, vocab, D, H, P):
    ks = jax.random.split(key, 16)
    s = 0.1
    rnd = lambda k, shape: jax.random.normal(k, shape, jnp.float32) * s
    M = 2 * H + 1
    params = dict(
        emb=rnd(ks[0], (vocab, D)),
        lstm_f_w_ih=rnd(ks[1], (4 * H, D)), lstm_f_w_hh=rnd(ks[2], (4 * H, H)),
        lstm_f_b_ih=rnd(ks[3], (4 * H,)),   lstm_f_b_hh=rnd(ks[4], (4 * H,)),
        lstm_b_w_ih=rnd(ks[5], (4 * H, D)), lstm_b_w_hh=rnd(ks[6], (4 * H, H)),
        lstm_b_b_ih=rnd(ks[7], (4 * H,)),   lstm_b_b_hh=rnd(ks[8], (4 * H,)),
        w_att=rnd(ks[9], (M + 2 * D, 1)),   b_att=rnd(ks[10], (1, 1)),
        gru_w_ih=rnd(ks[11], (M, 3 * D)),   gru_w_hh=rnd(ks[12], (D, 3 * D)),
        gru_b_ih=rnd(ks[13], (1, 3 * D)),   gru_b_hh=rnd(ks[14], (1, 3 * D)),
        w_dense=rnd(ks[15], (D, P)),
        b_dense=jnp.zeros((1, P), jnp.float32),
    )
    return params


if __name__ == "__main__":
    B, L = 2, 8
    BERT_DIM, HIDDEN_DIM, POLARITIES, HOPS = 32, 16, 3, 3
    VOCAB = 16

    key = jax.random.PRNGKey(0)
    params = init_params(key, VOCAB, BERT_DIM, HIDDEN_DIM, POLARITIES)

    # deterministic small token-index inputs (0 = padding)
    text_raw_indices = jnp.array([[5, 3, 7, 2, 9, 4, 0, 0],
                                  [6, 1, 8, 3, 5, 0, 0, 0]], dtype=jnp.int32)
    aspect_indices = jnp.array([[7, 2, 0, 0, 0, 0, 0, 0],
                                [8, 0, 0, 0, 0, 0, 0, 0]], dtype=jnp.int32)
    text_left_indices = jnp.array([[5, 3, 0, 0, 0, 0, 0, 0],
                                   [6, 0, 0, 0, 0, 0, 0, 0]], dtype=jnp.int32)

    out = ram_forward(text_raw_indices, aspect_indices, text_left_indices,
                      params, HOPS, HIDDEN_DIM)
    jax.block_until_ready(out)
    assert out.shape == (B, POLARITIES)
    print("KERNEL_OK")
</pallas_src>

<mosaic_0001>
module attributes {stable_mosaic.version = 11 : i64} {
  func.func @ram_hops_kernel(%arg0: i32, %arg1: memref<8x8x128xbf16, #tpu.memory_space<vmem>>, %arg2: memref<8x8xf32, #tpu.memory_space<vmem>>, %arg3: memref<1x128xf32, #tpu.memory_space<vmem>>, %arg4: memref<128x384xbf16, #tpu.memory_space<vmem>>, %arg5: memref<128x384xbf16, #tpu.memory_space<vmem>>, %arg6: memref<4x128xf32, #tpu.memory_space<vmem>>, %arg7: memref<128x128xbf16, #tpu.memory_space<vmem>>, %arg8: memref<1x128xf32, #tpu.memory_space<vmem>>, %arg9: memref<8x128xf32, #tpu.memory_space<vmem>>) attributes {dimension_semantics = [#tpu.dimension_semantics<parallel>], iteration_bounds = array<i64: 1>, scalar_prefetch = 0 : i64, scratch_operands = 0 : i64, tpu.core_type = #tpu.core_type<tc>, window_params = [{transform_indices = @transform_0, window_bounds = array<i64: 8, 8, 128>}, {transform_indices = @transform_1, window_bounds = array<i64: 8, 8>}, {pipeline_mode = #tpu.pipeline_mode<synchronous>, transform_indices = @transform_2, window_bounds = array<i64: 1, 128>}, {pipeline_mode = #tpu.pipeline_mode<synchronous>, transform_indices = @transform_3, window_bounds = array<i64: 128, 384>}, {pipeline_mode = #tpu.pipeline_mode<synchronous>, transform_indices = @transform_4, window_bounds = array<i64: 128, 384>}, {pipeline_mode = #tpu.pipeline_mode<synchronous>, transform_indices = @transform_5, window_bounds = array<i64: 4, 128>}, {pipeline_mode = #tpu.pipeline_mode<synchronous>, transform_indices = @transform_6, window_bounds = array<i64: 128, 128>}, {pipeline_mode = #tpu.pipeline_mode<synchronous>, transform_indices = @transform_7, window_bounds = array<i64: 1, 128>}, {transform_indices = @transform_8, window_bounds = array<i64: 8, 128>}]} {
    %c0 = arith.constant 0 : index
    %c0_0 = arith.constant 0 : index
    %0 = vector.load %arg2[%c0, %c0_0] : memref<8x8xf32, #tpu.memory_space<vmem>>, vector<8x8xf32>
    %c0_1 = arith.constant 0 : index
    %c0_2 = arith.constant 0 : index
    %1 = vector.load %arg3[%c0_1, %c0_2] : memref<1x128xf32, #tpu.memory_space<vmem>>, vector<1x128xf32>
    %c0_3 = arith.constant 0 : index
    %c0_4 = arith.constant 0 : index
    %2 = vector.load %arg4[%c0_3, %c0_4] : memref<128x384xbf16, #tpu.memory_space<vmem>>, vector<128x384xbf16>
    %c0_5 = arith.constant 0 : index
    %c0_6 = arith.constant 0 : index
    %3 = vector.load %arg5[%c0_5, %c0_6] : memref<128x384xbf16, #tpu.memory_space<vmem>>, vector<128x384xbf16>
    %c0_7 = arith.constant 0 : index
    %c0_8 = arith.constant 0 : index
    %4 = vector.load %arg6[%c0_7, %c0_8] : memref<4x128xf32, #tpu.memory_space<vmem>>, vector<4x128xf32>
    %5 = vector.extract_strided_slice %4 {offsets = [0, 0], sizes = [1, 128], strides = [1, 1]} : vector<4x128xf32> to vector<1x128xf32>
    %6 = vector.extract_strided_slice %4 {offsets = [1, 0], sizes = [1, 128], strides = [1, 1]} : vector<4x128xf32> to vector<1x128xf32>
    %7 = vector.extract_strided_slice %4 {offsets = [2, 0], sizes = [1, 128], strides = [1, 1]} : vector<4x128xf32> to vector<1x128xf32>
    %8 = vector.extract_strided_slice %4 {offsets = [3, 0], sizes = [1, 128], strides = [1, 1]} : vector<4x128xf32> to vector<1x128xf32>
    %cst = arith.constant 0.000000e+00 : f32
    %9 = vector.broadcast %cst : f32 to vector<8x128xf32>
    %10 = vector.broadcast %1 : vector<1x128xf32> to vector<8x128xf32>
    %11 = arith.mulf %9, %10 : vector<8x128xf32>
    %cst_9 = arith.constant dense<0.000000e+00> : vector<8xf32>
    %12 = vector.multi_reduction <add>, %11, %cst_9 [1] : vector<8x128xf32> to vector<8xf32>
    %13 = vector.shape_cast %12 : vector<8xf32> to vector<8x1xf32>
    %14 = vector.broadcast %13 : vector<8x1xf32> to vector<8x8xf32>
    %15 = arith.addf %0, %14 : vector<8x8xf32>
    %cst_10 = arith.constant dense<0xFF800000> : vector<8xf32>
    %16 = vector.multi_reduction <maximumf>, %15, %cst_10 [1] : vector<8x8xf32> to vector<8xf32>
    %17 = vector.shape_cast %16 : vector<8xf32> to vector<8x1xf32>
    %18 = vector.broadcast %17 : vector<8x1xf32> to vector<8x8xf32>
    %19 = arith.subf %15, %18 : vector<8x8xf32>
    %20 = math.exp %19 : vector<8x8xf32>
    %cst_11 = arith.constant dense<0.000000e+00> : vector<8xf32>
    %21 = vector.multi_reduction <add>, %20, %cst_11 [1] : vector<8x8xf32> to vector<8xf32>
    %22 = vector.shape_cast %21 : vector<8xf32> to vector<8x1xf32>
    %23 = tpu.reciprocal %22 {approx = true} : vector<8x1xf32> -> vector<8x1xf32>
    %24 = vector.broadcast %23 : vector<8x1xf32> to vector<8x8xf32>
    %25 = arith.mulf %20, %24 : vector<8x8xf32>
    %cst_12 = arith.constant 0.000000e+00 : f32
    %26 = vector.broadcast %cst_12 : f32 to vector<8x128xf32>
    %c0_13 = arith.constant 0 : index
    %c0_14 = arith.constant 0 : index
    %c0_15 = arith.constant 0 : index
    %27 = vector.load %arg1[%c0_13, %c0_14, %c0_15] : memref<8x8x128xbf16, #tpu.memory_space<vmem>>, vector<8x8x128xbf16>
    %28 = arith.extf %27 : vector<8x8x128xbf16> to vector<8x8x128xf32>
    %29 = vector.shape_cast %25 : vector<8x8xf32> to vector<8x8x1xf32>
    %30 = vector.broadcast %29 : vector<8x8x1xf32> to vector<8x8x128xf32>
    %31 = arith.mulf %30, %28 : vector<8x8x128xf32>
    %cst_16 = arith.constant dense<0.000000e+00> : vector<8x128xf32>
    %32 = vector.multi_reduction <add>, %31, %cst_16 [1] : vector<8x8x128xf32> to vector<8x128xf32>
    %33 = arith.addf %26, %32 : vector<8x128xf32>
    %34 = arith.truncf %33 : vector<8x128xf32> to vector<8x128xbf16>
    %cst_17 = arith.constant dense<0.000000e+00> : vector<8x384xf32>
    %35 = tpu.matmul %34, %2, %cst_17 {dimension_numbers = #tpu.dot_dimension_numbers<[1], [0], [0], [1], [0, 0, 1, 1], [], []>} : vector<8x128xbf16>, vector<128x384xbf16>, vector<8x384xf32> -> vector<8x384xf32>
    %36 = arith.truncf %9 : vector<8x128xf32> to vector<8x128xbf16>
    %cst_18 = arith.constant dense<0.000000e+00> : vector<8x384xf32>
    %37 = tpu.matmul %36, %3, %cst_18 {dimension_numbers = #tpu.dot_dimension_numbers<[1], [0], [0], [1], [0, 0, 1, 1], [], []>} : vector<8x128xbf16>, vector<128x384xbf16>, vector<8x384xf32> -> vector<8x384xf32>
    %38 = vector.extract_strided_slice %35 {offsets = [0, 0], sizes = [8, 128], strides = [1, 1]} : vector<8x384xf32> to vector<8x128xf32>
    %39 = vector.extract_strided_slice %37 {offsets = [0, 0], sizes = [8, 128], strides = [1, 1]} : vector<8x384xf32> to vector<8x128xf32>
    %40 = arith.addf %38, %39 : vector<8x128xf32>
    %41 = vector.broadcast %5 : vector<1x128xf32> to vector<8x128xf32>
    %42 = arith.addf %40, %41 : vector<8x128xf32>
    %43 = arith.negf %42 : vector<8x128xf32>
    %44 = math.exp %43 : vector<8x128xf32>
    %cst_19 = arith.constant 1.000000e+00 : f32
    %45 = vector.broadcast %cst_19 : f32 to vector<8x128xf32>
    %46 = arith.addf %45, %44 : vector<8x128xf32>
    %47 = arith.divf %45, %46 : vector<8x128xf32>
    %48 = vector.extract_strided_slice %35 {offsets = [0, 128], sizes = [8, 128], strides = [1, 1]} : vector<8x384xf32> to vector<8x128xf32>
    %49 = vector.extract_strided_slice %37 {offsets = [0, 128], sizes = [8, 128], strides = [1, 1]} : vector<8x384xf32> to vector<8x128xf32>
    %50 = arith.addf %48, %49 : vector<8x128xf32>
    %51 = vector.broadcast %6 : vector<1x128xf32> to vector<8x128xf32>
    %52 = arith.addf %50, %51 : vector<8x128xf32>
    %53 = arith.negf %52 : vector<8x128xf32>
    %54 = math.exp %53 : vector<8x128xf32>
    %cst_20 = arith.constant 1.000000e+00 : f32
    %55 = vector.broadcast %cst_20 : f32 to vector<8x128xf32>
    %56 = arith.addf %55, %54 : vector<8x128xf32>
    %57 = arith.divf %55, %56 : vector<8x128xf32>
    %58 = vector.extract_strided_slice %35 {offsets = [0, 256], sizes = [8, 128], strides = [1, 1]} : vector<8x384xf32> to vector<8x128xf32>
    %59 = vector.broadcast %7 : vector<1x128xf32> to vector<8x128xf32>
    %60 = arith.addf %58, %59 : vector<8x128xf32>
    %61 = vector.extract_strided_slice %37 {offsets = [0, 256], sizes = [8, 128], strides = [1, 1]} : vector<8x384xf32> to vector<8x128xf32>
    %62 = vector.broadcast %8 : vector<1x128xf32> to vector<8x128xf32>
    %63 = arith.addf %61, %62 : vector<8x128xf32>
    %64 = arith.mulf %47, %63 : vector<8x128xf32>
    %65 = arith.addf %60, %64 : vector<8x128xf32>
    %66 = math.tanh %65 : vector<8x128xf32>
    %cst_21 = arith.constant 1.000000e+00 : f32
    %67 = vector.broadcast %cst_21 : f32 to vector<8x128xf32>
    %68 = arith.subf %67, %57 : vector<8x128xf32>
    %69 = arith.mulf %68, %66 : vector<8x128xf32>
    %70 = arith.mulf %57, %9 : vector<8x128xf32>
    %71 = arith.addf %69, %70 : vector<8x128xf32>
    %72 = vector.broadcast %1 : vector<1x128xf32> to vector<8x128xf32>
    %73 = arith.mulf %71, %72 : vector<8x128xf32>
    %cst_22 = arith.constant dense<0.000000e+00> : vector<8xf32>
    %74 = vector.multi_reduction <add>, %73, %cst_22 [1] : vector<8x128xf32> to vector<8xf32>
    %75 = vector.shape_cast %74 : vector<8xf32> to vector<8x1xf32>
    %76 = vector.broadcast %75 : vector<8x1xf32> to vector<8x8xf32>
    %77 = arith.addf %0, %76 : vector<8x8xf32>
    %cst_23 = arith.constant dense<0xFF800000> : vector<8xf32>
    %78 = vector.multi_reduction <maximumf>, %77, %cst_23 [1] : vector<8x8xf32> to vector<8xf32>
    %79 = vector.shape_cast %78 : vector<8xf32> to vector<8x1xf32>
    %80 = vector.broadcast %79 : vector<8x1xf32> to vector<8x8xf32>
    %81 = arith.subf %77, %80 : vector<8x8xf32>
    %82 = math.exp %81 : vector<8x8xf32>
    %cst_24 = arith.constant dense<0.000000e+00> : vector<8xf32>
    %83 = vector.multi_reduction <add>, %82, %cst_24 [1] : vector<8x8xf32> to vector<8xf32>
    %84 = vector.shape_cast %83 : vector<8xf32> to vector<8x1xf32>
    %85 = tpu.reciprocal %84 {approx = true} : vector<8x1xf32> -> vector<8x1xf32>
    %86 = vector.broadcast %85 : vector<8x1xf32> to vector<8x8xf32>
    %87 = arith.mulf %82, %86 : vector<8x8xf32>
    %cst_25 = arith.constant 0.000000e+00 : f32
    %88 = vector.broadcast %cst_25 : f32 to vector<8x128xf32>
    %c0_26 = arith.constant 0 : index
    %c0_27 = arith.constant 0 : index
    %c0_28 = arith.constant 0 : index
    %89 = vector.load %arg1[%c0_26, %c0_27, %c0_28] : memref<8x8x128xbf16, #tpu.memory_space<vmem>>, vector<8x8x128xbf16>
    %90 = arith.extf %89 : vector<8x8x128xbf16> to vector<8x8x128xf32>
    %91 = vector.shape_cast %87 : vector<8x8xf32> to vector<8x8x1xf32>
    %92 = vector.broadcast %91 : vector<8x8x1xf32> to vector<8x8x128xf32>
    %93 = arith.mulf %92, %90 : vector<8x8x128xf32>
    %cst_29 = arith.constant dense<0.000000e+00> : vector<8x128xf32>
    %94 = vector.multi_reduction <add>, %93, %cst_29 [1] : vector<8x8x128xf32> to vector<8x128xf32>
    %95 = arith.addf %88, %94 : vector<8x128xf32>
    %96 = arith.truncf %95 : vector<8x128xf32> to vector<8x128xbf16>
    %cst_30 = arith.constant dense<0.000000e+00> : vector<8x384xf32>
    %97 = tpu.matmul %96, %2, %cst_30 {dimension_numbers = #tpu.dot_dimension_numbers<[1], [0], [0], [1], [0, 0, 1, 1], [], []>} : vector<8x128xbf16>, vector<128x384xbf16>, vector<8x384xf32> -> vector<8x384xf32>
    %98 = arith.truncf %71 : vector<8x128xf32> to vector<8x128xbf16>
    %cst_31 = arith.constant dense<0.000000e+00> : vector<8x384xf32>
    %99 = tpu.matmul %98, %3, %cst_31 {dimension_numbers = #tpu.dot_dimension_numbers<[1], [0], [0], [1], [0, 0, 1, 1], [], []>} : vector<8x128xbf16>, vector<128x384xbf16>, vector<8x384xf32> -> vector<8x384xf32>
    %100 = vector.extract_strided_slice %97 {offsets = [0, 0], sizes = [8, 128], strides = [1, 1]} : vector<8x384xf32> to vector<8x128xf32>
    %101 = vector.extract_strided_slice %99 {offsets = [0, 0], sizes = [8, 128], strides = [1, 1]} : vector<8x384xf32> to vector<8x128xf32>
    %102 = arith.addf %100, %101 : vector<8x128xf32>
    %103 = vector.broadcast %5 : vector<1x128xf32> to vector<8x128xf32>
    %104 = arith.addf %102, %103 : vector<8x128xf32>
    %105 = arith.negf %104 : vector<8x128xf32>
    %106 = math.exp %105 : vector<8x128xf32>
    %cst_32 = arith.constant 1.000000e+00 : f32
    %107 = vector.broadcast %cst_32 : f32 to vector<8x128xf32>
    %108 = arith.addf %107, %106 : vector<8x128xf32>
    %109 = arith.divf %107, %108 : vector<8x128xf32>
    %110 = vector.extract_strided_slice %97 {offsets = [0, 128], sizes = [8, 128], strides = [1, 1]} : vector<8x384xf32> to vector<8x128xf32>
    %111 = vector.extract_strided_slice %99 {offsets = [0, 128], sizes = [8, 128], strides = [1, 1]} : vector<8x384xf32> to vector<8x128xf32>
    %112 = arith.addf %110, %111 : vector<8x128xf32>
    %113 = vector.broadcast %6 : vector<1x128xf32> to vector<8x128xf32>
    %114 = arith.addf %112, %113 : vector<8x128xf32>
    %115 = arith.negf %114 : vector<8x128xf32>
    %116 = math.exp %115 : vector<8x128xf32>
    %cst_33 = arith.constant 1.000000e+00 : f32
    %117 = vector.broadcast %cst_33 : f32 to vector<8x128xf32>
    %118 = arith.addf %117, %116 : vector<8x128xf32>
    %119 = arith.divf %117, %118 : vector<8x128xf32>
    %120 = vector.extract_strided_slice %97 {offsets = [0, 256], sizes = [8, 128], strides = [1, 1]} : vector<8x384xf32> to vector<8x128xf32>
    %121 = vector.broadcast %7 : vector<1x128xf32> to vector<8x128xf32>
    %122 = arith.addf %120, %121 : vector<8x128xf32>
    %123 = vector.extract_strided_slice %99 {offsets = [0, 256], sizes = [8, 128], strides = [1, 1]} : vector<8x384xf32> to vector<8x128xf32>
    %124 = vector.broadcast %8 : vector<1x128xf32> to vector<8x128xf32>
    %125 = arith.addf %123, %124 : vector<8x128xf32>
    %126 = arith.mulf %109, %125 : vector<8x128xf32>
    %127 = arith.addf %122, %126 : vector<8x128xf32>
    %128 = math.tanh %127 : vector<8x128xf32>
    %cst_34 = arith.constant 1.000000e+00 : f32
    %129 = vector.broadcast %cst_34 : f32 to vector<8x128xf32>
    %130 = arith.subf %129, %119 : vector<8x128xf32>
    %131 = arith.mulf %130, %128 : vector<8x128xf32>
    %132 = arith.mulf %119, %71 : vector<8x128xf32>
    %133 = arith.addf %131, %132 : vector<8x128xf32>
    %134 = vector.broadcast %1 : vector<1x128xf32> to vector<8x128xf32>
    %135 = arith.mulf %133, %134 : vector<8x128xf32>
    %cst_35 = arith.constant dense<0.000000e+00> : vector<8xf32>
    %136 = vector.multi_reduction <add>, %135, %cst_35 [1] : vector<8x128xf32> to vector<8xf32>
    %137 = vector.shape_cast %136 : vector<8xf32> to vector<8x1xf32>
    %138 = vector.broadcast %137 : vector<8x1xf32> to vector<8x8xf32>
    %139 = arith.addf %0, %138 : vector<8x8xf32>
    %cst_36 = arith.constant dense<0xFF800000> : vector<8xf32>
    %140 = vector.multi_reduction <maximumf>, %139, %cst_36 [1] : vector<8x8xf32> to vector<8xf32>
    %141 = vector.shape_cast %140 : vector<8xf32> to vector<8x1xf32>
    %142 = vector.broadcast %141 : vector<8x1xf32> to vector<8x8xf32>
    %143 = arith.subf %139, %142 : vector<8x8xf32>
    %144 = math.exp %143 : vector<8x8xf32>
    %cst_37 = arith.constant dense<0.000000e+00> : vector<8xf32>
    %145 = vector.multi_reduction <add>, %144, %cst_37 [1] : vector<8x8xf32> to vector<8xf32>
    %146 = vector.shape_cast %145 : vector<8xf32> to vector<8x1xf32>
    %147 = vector.broadcast %146 : vector<8x1xf32> to vector<8x8xf32>
    %148 = arith.divf %144, %147 : vector<8x8xf32>
    %cst_38 = arith.constant 0.000000e+00 : f32
    %149 = vector.broadcast %cst_38 : f32 to vector<8x128xf32>
    %c0_39 = arith.constant 0 : index
    %c0_40 = arith.constant 0 : index
    %c0_41 = arith.constant 0 : index
    %150 = vector.load %arg1[%c0_39, %c0_40, %c0_41] : memref<8x8x128xbf16, #tpu.memory_space<vmem>>, vector<8x8x128xbf16>
    %151 = arith.extf %150 : vector<8x8x128xbf16> to vector<8x8x128xf32>
    %152 = vector.shape_cast %148 : vector<8x8xf32> to vector<8x8x1xf32>
    %153 = vector.broadcast %152 : vector<8x8x1xf32> to vector<8x8x128xf32>
    %154 = arith.mulf %153, %151 : vector<8x8x128xf32>
    %cst_42 = arith.constant dense<0.000000e+00> : vector<8x128xf32>
    %155 = vector.multi_reduction <add>, %154, %cst_42 [1] : vector<8x8x128xf32> to vector<8x128xf32>
    %156 = arith.addf %149, %155 : vector<8x128xf32>
    %157 = arith.truncf %156 : vector<8x128xf32> to vector<8x128xbf16>
    %cst_43 = arith.constant dense<0.000000e+00> : vector<8x384xf32>
    %158 = tpu.matmul %157, %2, %cst_43 {dimension_numbers = #tpu.dot_dimension_numbers<[1], [0], [0], [1], [0, 0, 1, 1], [], []>} : vector<8x128xbf16>, vector<128x384xbf16>, vector<8x384xf32> -> vector<8x384xf32>
    %159 = arith.truncf %133 : vector<8x128xf32> to vector<8x128xbf16>
    %cst_44 = arith.constant dense<0.000000e+00> : vector<8x384xf32>
    %160 = tpu.matmul %159, %3, %cst_44 {dimension_numbers = #tpu.dot_dimension_numbers<[1], [0], [0], [1], [0, 0, 1, 1], [], []>} : vector<8x128xbf16>, vector<128x384xbf16>, vector<8x384xf32> -> vector<8x384xf32>
    %161 = vector.extract_strided_slice %158 {offsets = [0, 0], sizes = [8, 128], strides = [1, 1]} : vector<8x384xf32> to vector<8x128xf32>
    %162 = vector.extract_strided_slice %160 {offsets = [0, 0], sizes = [8, 128], strides = [1, 1]} : vector<8x384xf32> to vector<8x128xf32>
    %163 = arith.addf %161, %162 : vector<8x128xf32>
    %164 = vector.broadcast %5 : vector<1x128xf32> to vector<8x128xf32>
    %165 = arith.addf %163, %164 : vector<8x128xf32>
    %166 = arith.negf %165 : vector<8x128xf32>
    %167 = math.exp %166 : vector<8x128xf32>
    %cst_45 = arith.constant 1.000000e+00 : f32
    %168 = vector.broadcast %cst_45 : f32 to vector<8x128xf32>
    %169 = arith.addf %168, %167 : vector<8x128xf32>
    %170 = arith.divf %168, %169 : vector<8x128xf32>
    %171 = vector.extract_strided_slice %158 {offsets = [0, 128], sizes = [8, 128], strides = [1, 1]} : vector<8x384xf32> to vector<8x128xf32>
    %172 = vector.extract_strided_slice %160 {offsets = [0, 128], sizes = [8, 128], strides = [1, 1]} : vector<8x384xf32> to vector<8x128xf32>
    %173 = arith.addf %171, %172 : vector<8x128xf32>
    %174 = vector.broadcast %6 : vector<1x128xf32> to vector<8x128xf32>
    %175 = arith.addf %173, %174 : vector<8x128xf32>
    %176 = arith.negf %175 : vector<8x128xf32>
    %177 = math.exp %176 : vector<8x128xf32>
    %cst_46 = arith.constant 1.000000e+00 : f32
    %178 = vector.broadcast %cst_46 : f32 to vector<8x128xf32>
    %179 = arith.addf %178, %177 : vector<8x128xf32>
    %180 = arith.divf %178, %179 : vector<8x128xf32>
    %181 = vector.extract_strided_slice %158 {offsets = [0, 256], sizes = [8, 128], strides = [1, 1]} : vector<8x384xf32> to vector<8x128xf32>
    %182 = vector.broadcast %7 : vector<1x128xf32> to vector<8x128xf32>
    %183 = arith.addf %181, %182 : vector<8x128xf32>
    %184 = vector.extract_strided_slice %160 {offsets = [0, 256], sizes = [8, 128], strides = [1, 1]} : vector<8x384xf32> to vector<8x128xf32>
    %185 = vector.broadcast %8 : vector<1x128xf32> to vector<8x128xf32>
    %186 = arith.addf %184, %185 : vector<8x128xf32>
    %187 = arith.mulf %170, %186 : vector<8x128xf32>
    %188 = arith.addf %183, %187 : vector<8x128xf32>
    %189 = math.tanh %188 : vector<8x128xf32>
    %cst_47 = arith.constant 1.000000e+00 : f32
    %190 = vector.broadcast %cst_47 : f32 to vector<8x128xf32>
    %191 = arith.subf %190, %180 : vector<8x128xf32>
    %192 = arith.mulf %191, %189 : vector<8x128xf32>
    %193 = arith.mulf %180, %133 : vector<8x128xf32>
    %194 = arith.addf %192, %193 : vector<8x128xf32>
    %c0_48 = arith.constant 0 : index
    %c0_49 = arith.constant 0 : index
    %195 = vector.load %arg7[%c0_48, %c0_49] : memref<128x128xbf16, #tpu.memory_space<vmem>>, vector<128x128xbf16>
    %196 = arith.truncf %194 : vector<8x128xf32> to vector<8x128xbf16>
    %cst_50 = arith.constant dense<0.000000e+00> : vector<8x128xf32>
    %197 = tpu.matmul %196, %195, %cst_50 {dimension_numbers = #tpu.dot_dimension_numbers<[1], [0], [0], [1], [0, 0, 1, 1], [], []>} : vector<8x128xbf16>, vector<128x128xbf16>, vector<8x128xf32> -> vector<8x128xf32>
    %c0_51 = arith.constant 0 : index
    %c0_52 = arith.constant 0 : index
    %198 = vector.load %arg8[%c0_51, %c0_52] : memref<1x128xf32, #tpu.memory_space<vmem>>, vector<1x128xf32>
    %199 = vector.broadcast %198 : vector<1x128xf32> to vector<8x128xf32>
    %200 = arith.addf %197, %199 : vector<8x128xf32>
    %c0_53 = arith.constant 0 : index
    %c0_54 = arith.constant 0 : index
    %201 = vector.load %arg9[%c0_53, %c0_54] : memref<8x128xf32, #tpu.memory_space<vmem>>, vector<8x128xf32>
    tpu.vector_store %arg9[%c0_53, %c0_54], %200 {strides = array<i32>} : memref<8x128xf32, #tpu.memory_space<vmem>>, vector<8x128xf32>,
    return
  }
  func.func @transform_0(%arg0: i32) -> (i32, i32, i32) {
    %c0_i32 = arith.constant 0 : i32
    %c0_i32_0 = arith.constant 0 : i32
    %c0_i32_1 = arith.constant 0 : i32
    return %arg0, %c0_i32, %c0_i32_0 : i32, i32, i32
  }
  func.func @transform_1(%arg0: i32) -> (i32, i32) {
    %c0_i32 = arith.constant 0 : i32
    %c0_i32_0 = arith.constant 0 : i32
    return %arg0, %c0_i32 : i32, i32
  }
  func.func @transform_2(%arg0: i32) -> (i32, i32) {
    %c0_i32 = arith.constant 0 : i32
    %c0_i32_0 = arith.constant 0 : i32
    %c0_i32_1 = arith.constant 0 : i32
    return %c0_i32, %c0_i32_0 : i32, i32
  }
  func.func @transform_3(%arg0: i32) -> (i32, i32) {
    %c0_i32 = arith.constant 0 : i32
    %c0_i32_0 = arith.constant 0 : i32
    %c0_i32_1 = arith.constant 0 : i32
    return %c0_i32, %c0_i32_0 : i32, i32
  }
  func.func @transform_4(%arg0: i32) -> (i32, i32) {
    %c0_i32 = arith.constant 0 : i32
    %c0_i32_0 = arith.constant 0 : i32
    %c0_i32_1 = arith.constant 0 : i32
    return %c0_i32, %c0_i32_0 : i32, i32
  }
  func.func @transform_5(%arg0: i32) -> (i32, i32) {
    %c0_i32 = arith.constant 0 : i32
    %c0_i32_0 = arith.constant 0 : i32
    %c0_i32_1 = arith.constant 0 : i32
    return %c0_i32, %c0_i32_0 : i32, i32
  }
  func.func @transform_6(%arg0: i32) -> (i32, i32) {
    %c0_i32 = arith.constant 0 : i32
    %c0_i32_0 = arith.constant 0 : i32
    %c0_i32_1 = arith.constant 0 : i32
    return %c0_i32, %c0_i32_0 : i32, i32
  }
  func.func @transform_7(%arg0: i32) -> (i32, i32) {
    %c0_i32 = arith.constant 0 : i32
    %c0_i32_0 = arith.constant 0 : i32
    %c0_i32_1 = arith.constant 0 : i32
    return %c0_i32, %c0_i32_0 : i32, i32
  }
  func.func @transform_8(%arg0: i32) -> (i32, i32) {
    %c0_i32 = arith.constant 0 : i32
    %c0_i32_0 = arith.constant 0 : i32
    return %arg0, %c0_i32 : i32, i32
  }
}

</mosaic_0001>

<llo_original>
// kernel: tpu_custom_call.1
$region0: #{tpu_custom_call.1}
  #allocation0 [shape = 'u32[]', space=smem, size = 0x4, offset = 0x4, fixed_abs, tag = 'smem constant byte address 0x4 - core index']
  #allocation1 [shape = 'u32[144,128]{1,0:T(1,128)}', space=vmem, size = 0x12000, scoped, tag = 'internal scratch']
  %s0 = inlined_call_operand.hbm [shape: bf16[8,8,128], index: 0, kind: input, shape index: {}]
  %s1 = inlined_call_operand.hbm [shape: f32[8,8], index: 1, kind: input, shape index: {}]
  %s2 = inlined_call_operand.vmem [shape: f32[1,128], index: 2, kind: input, shape index: {}]
  %s3 = inlined_call_operand.hbm [shape: bf16[128,384], index: 3, kind: input, shape index: {}]
  %s4 = inlined_call_operand.hbm [shape: bf16[128,384], index: 4, kind: input, shape index: {}]
  %s5 = inlined_call_operand.vmem [shape: f32[4,128], index: 5, kind: input, shape index: {}]
  %s6 = inlined_call_operand.hbm [shape: bf16[128,128], index: 6, kind: input, shape index: {}]
  %s7 = inlined_call_operand.vmem [shape: f32[1,128], index: 7, kind: input, shape index: {}]
  %s8 = inlined_call_operand.hbm [shape: f32[8,128], index: 8, kind: output, shape index: {}]
  %s9 = sld [smem:[#allocation0]]
  $region62: #{tpu_custom_call.1} parent=0
    _
  %s11 = ssub.s32 1, %s9
  %s12 = scalar_select 0, %s11, %s9
  $region1: #{tpu_custom_call.1} parent=0
    #allocation2 [shape = 'u8[16384]{0}', space=vmem, size = 0x4000, scoped, tag = 'input window, operand 0, single buffered']
    #allocation3 [shape = 's32[1]{0}', space=sflag, size = 0x4, scoped, tag = 'scoped memory for tpu_custom_call.1']
    #allocation4 [shape = 's32[1]{0}', space=sflag, size = 0x4, scoped, tag = 'scoped memory for tpu_custom_call.1']
    #allocation5 [shape = 'u8[4096]{0}', space=vmem, size = 0x1000, scoped, tag = 'input window, operand 1, single buffered']
    #allocation6 [shape = 's32[1]{0}', space=sflag, size = 0x4, scoped, tag = 'scoped memory for tpu_custom_call.1']
    #allocation7 [shape = 'u8[98304]{0}', space=vmem, size = 0x18000, scoped, tag = 'input window, operand 3, single buffered']
    #allocation8 [shape = 'u8[98304]{0}', space=vmem, size = 0x18000, scoped, tag = 'input window, operand 4, single buffered']
    #allocation9 [shape = 's32[1]{0}', space=sflag, size = 0x4, scoped, tag = 'scoped memory for tpu_custom_call.1']
    #allocation10 [shape = 'u8[32768]{0}', space=vmem, size = 0x8000, scoped, tag = 'input window, operand 6, single buffered']
    #allocation11 [shape = 'u8[4096]{0}', space=vmem, size = 0x1000, scoped, tag = 'output window, operand 0, single buffered']
    %13 = vsyncpa [#allocation3], 0
    %14 = vsyncpa [#allocation6], 0
    %15 = vsyncpa [#allocation9], 0
    %16 = vsyncpa [#allocation4], 0
    // Predicated region
    $region2: #{tpu_custom_call.1} parent=1 // pred_check
      _
    $region3: #{tpu_custom_call.1} parent=1 // pred_check_branch
      %18 = sbr.rel (0) target = $region5
    $region4: #{tpu_custom_call.1} parent=1 // pred_region
      %s20 = ssub.s32 512, 512
      %21 = vsyncadd [#allocation3], %s20
      %s22 = sshll.u32 [#allocation2], 4
      %s23 = int_to_ptr.vmem [resolvable:$true] %s22
      %28 = dma.hbm_to_vmem [thread:$0]  %s0, 512, %s23, [#allocation3], 64, 64, 4
    $region5: #{tpu_custom_call.1} parent=1 // pred_fallthru
      _
    // Predicated region
    $region6: #{tpu_custom_call.1} parent=1 // pred_check
      _
    $region7: #{tpu_custom_call.1} parent=1 // pred_check_branch
      %30 = sbr.rel (0) target = $region9
    $region8: #{tpu_custom_call.1} parent=1 // pred_region
      %s32 = ssub.s32 128, 128
      %33 = vsyncadd [#allocation6], %s32
      %s35 = sshll.u32 [#allocation5], 4
      %s36 = int_to_ptr.vmem [resolvable:$true] %s35
      %38 = dma.hbm_to_vmem [thread:$0]  %s1, 128, %s36, [#allocation6]
    $region9: #{tpu_custom_call.1} parent=1 // pred_fallthru
      _
    // Predicated region
    $region10: #{tpu_custom_call.1} parent=1 // pred_check
      _
    $region11: #{tpu_custom_call.1} parent=1 // pred_check_branch
      %40 = sbr.rel (0) target = $region13
    $region12: #{tpu_custom_call.1} parent=1 // pred_region
      _
    $region13: #{tpu_custom_call.1} parent=1 // pred_fallthru
      _
    // Predicated region
    $region14: #{tpu_custom_call.1} parent=1 // pred_check
      _
    $region15: #{tpu_custom_call.1} parent=1 // pred_check_branch
      %42 = sbr.rel (0) target = $region17
    $region16: #{tpu_custom_call.1} parent=1 // pred_region
      %s44 = ssub.s32 3072, 3072
      %45 = vsyncadd [#allocation6], %s44
      %s46 = sshll.u32 [#allocation7], 4
      %s47 = int_to_ptr.vmem [resolvable:$true] %s46
      %52 = dma.hbm_to_vmem [thread:$0]  %s3, 3072, %s47, [#allocation6], 192, 192, 12
    $region17: #{tpu_custom_call.1} parent=1 // pred_fallthru
      _
    // Predicated region
    $region18: #{tpu_custom_call.1} parent=1 // pred_check
      _
    $region19: #{tpu_custom_call.1} parent=1 // pred_check_branch
      %54 = sbr.rel (0) target = $region21
    $region20: #{tpu_custom_call.1} parent=1 // pred_region
      %s56 = ssub.s32 3072, 3072
      %57 = vsyncadd [#allocation9], %s56
      %s58 = sshll.u32 [#allocation8], 4
      %s59 = int_to_ptr.vmem [resolvable:$true] %s58
      %64 = dma.hbm_to_vmem [thread:$0]  %s4, 3072, %s59, [#allocation9], 192, 192, 12
    $region21: #{tpu_custom_call.1} parent=1 // pred_fallthru
      _
    // Predicated region
    $region22: #{tpu_custom_call.1} parent=1 // pred_check
      _
    $region23: #{tpu_custom_call.1} parent=1 // pred_check_branch
      %66 = sbr.rel (0) target = $region25
    $region24: #{tpu_custom_call.1} parent=1 // pred_region
      _
    $region25: #{tpu_custom_call.1} parent=1 // pred_fallthru
      _
    // Predicated region
    $region26: #{tpu_custom_call.1} parent=1 // pred_check
      _
    $region27: #{tpu_custom_call.1} parent=1 // pred_check_branch
      %68 = sbr.rel (0) target = $region29
    $region28: #{tpu_custom_call.1} parent=1 // pred_region
      %s70 = ssub.s32 1024, 1024
      %71 = vsyncadd [#allocation9], %s70
      %s72 = sshll.u32 [#allocation10], 4
      %s73 = int_to_ptr.vmem [resolvable:$true] %s72
      %78 = dma.hbm_to_vmem [thread:$0]  %s6, 1024, %s73, [#allocation9], 64, 64, 4
    $region29: #{tpu_custom_call.1} parent=1 // pred_fallthru
      _
    // Predicated region
    $region30: #{tpu_custom_call.1} parent=1 // pred_check
      _
    $region31: #{tpu_custom_call.1} parent=1 // pred_check_branch
      %80 = sbr.rel (0) target = $region33
    $region32: #{tpu_custom_call.1} parent=1 // pred_region
      _
    $region33: #{tpu_custom_call.1} parent=1 // pred_fallthru
      _
    // Predicated region
    $region34: #{tpu_custom_call.1} parent=1 // pred_check
      _
    $region35: #{tpu_custom_call.1} parent=1 // pred_check_branch
      %82 = sbr.rel (0) target = $region37
    $region36: #{tpu_custom_call.1} parent=1 // pred_region
      %83 = dma.done [#allocation3], 512
    $region37: #{tpu_custom_call.1} parent=1 // pred_fallthru
      _
    // Predicated region
    $region38: #{tpu_custom_call.1} parent=1 // pred_check
      _
    $region39: #{tpu_custom_call.1} parent=1 // pred_check_branch
      %85 = sbr.rel (0) target = $region41
    $region40: #{tpu_custom_call.1} parent=1 // pred_region
      %86 = dma.done [#allocation6], 128
    $region41: #{tpu_custom_call.1} parent=1 // pred_fallthru
      _
    // Predicated region
    $region42: #{tpu_custom_call.1} parent=1 // pred_check
      _
    $region43: #{tpu_custom_call.1} parent=1 // pred_check_branch
      %88 = sbr.rel (0) target = $region45
    $region44: #{tpu_custom_call.1} parent=1 // pred_region
      %89 = dma.done [#allocation6], 3072
    $region45: #{tpu_custom_call.1} parent=1 // pred_fallthru
      _
    // Predicated region
    $region46: #{tpu_custom_call.1} parent=1 // pred_check
      _
    $region47: #{tpu_custom_call.1} parent=1 // pred_check_branch
      %91 = sbr.rel (0) target = $region49
    $region48: #{tpu_custom_call.1} parent=1 // pred_region
      %92 = dma.done [#allocation9], 3072
    $region49: #{tpu_custom_call.1} parent=1 // pred_fallthru
      _
    // Predicated region
    $region50: #{tpu_custom_call.1} parent=1 // pred_check
      _
    $region51: #{tpu_custom_call.1} parent=1 // pred_check_branch
      %94 = sbr.rel (0) target = $region53
    $region52: #{tpu_custom_call.1} parent=1 // pred_region
      %95 = dma.done [#allocation9], 1024
    $region53: #{tpu_custom_call.1} parent=1 // pred_fallthru
      _
    %v97 = vld [vmem:[#allocation5] sm:$0xff]
    %v98 = vld [vmem:[%s2] sm:$0x1]
    %v99 = vld [vmem:[#allocation7] sm:$0xff]
    %v100 = vld [vmem:[#allocation7 + $0x8] sm:$0xf]
    %v101 = vld [vmem:[#allocation7 + $0xc] sm:$0xff]
    %v102 = vld [vmem:[#allocation7 + $0x14] sm:$0xf]
    %v103 = vld [vmem:[#allocation7 + $0x18] sm:$0xff]
    %v104 = vld [vmem:[#allocation7 + $0x20] sm:$0xf]
    %v105 = vld [vmem:[#allocation7 + $0x24] sm:$0xff]
    %v106 = vld [vmem:[#allocation7 + $0x2c] sm:$0xf]
    %v107 = vld [vmem:[#allocation7 + $0x30] sm:$0xff]
    %v108 = vld [vmem:[#allocation7 + $0x38] sm:$0xf]
    %v109 = vld [vmem:[#allocation7 + $0x3c] sm:$0xff]
    %v110 = vld [vmem:[#allocation7 + $0x44] sm:$0xf]
    %v111 = vld [vmem:[#allocation7 + $0x48] sm:$0xff]
    %v112 = vld [vmem:[#allocation7 + $0x50] sm:$0xf]
    %v113 = vld [vmem:[#allocation7 + $0x54] sm:$0xff]
    %v114 = vld [vmem:[#allocation7 + $0x5c] sm:$0xf]
    %v115 = vld [vmem:[#allocation7 + $0x60] sm:$0xff]
    %v116 = vld [vmem:[#allocation7 + $0x68] sm:$0xf]
    %v117 = vld [vmem:[#allocation7 + $0x6c] sm:$0xff]
    %v118 = vld [vmem:[#allocation7 + $0x74] sm:$0xf]
    %v119 = vld [vmem:[#allocation7 + $0x78] sm:$0xff]
    %v120 = vld [vmem:[#allocation7 + $0x80] sm:$0xf]
    %v121 = vld [vmem:[#allocation7 + $0x84] sm:$0xff]
    %v122 = vld [vmem:[#allocation7 + $0x8c] sm:$0xf]
    %v123 = vld [vmem:[#allocation7 + $0x90] sm:$0xff]
    %v124 = vld [vmem:[#allocation7 + $0x98] sm:$0xf]
    %v125 = vld [vmem:[#allocation7 + $0x9c] sm:$0xff]
    %v126 = vld [vmem:[#allocation7 + $0xa4] sm:$0xf]
    %v127 = vld [vmem:[#allocation7 + $0xa8] sm:$0xff]
    %v128 = vld [vmem:[#allocation7 + $0xb0] sm:$0xf]
    %v129 = vld [vmem:[#allocation7 + $0xb4] sm:$0xff]
    %v130 = vld [vmem:[#allocation7 + $0xbc] sm:$0xf]
    %v131 = vld [vmem:[#allocation8] sm:$0xff]
    %v132 = vld [vmem:[#allocation8 + $0x8] sm:$0xf]
    %v133 = vld [vmem:[#allocation8 + $0xc] sm:$0xff]
    %v134 = vld [vmem:[#allocation8 + $0x14] sm:$0xf]
    %v135 = vld [vmem:[#allocation8 + $0x18] sm:$0xff]
    %v136 = vld [vmem:[#allocation8 + $0x20] sm:$0xf]
    %v137 = vld [vmem:[#allocation8 + $0x24] sm:$0xff]
    %v138 = vld [vmem:[#allocation8 + $0x2c] sm:$0xf]
    %v139 = vld [vmem:[#allocation8 + $0x30] sm:$0xff]
    %v140 = vld [vmem:[#allocation8 + $0x38] sm:$0xf]
    %v141 = vld [vmem:[#allocation8 + $0x3c] sm:$0xff]
    %v142 = vld [vmem:[#allocation8 + $0x44] sm:$0xf]
    %v143 = vld [vmem:[#allocation8 + $0x48] sm:$0xff]
    %v144 = vld [vmem:[#allocation8 + $0x50] sm:$0xf]
    %v145 = vld [vmem:[#allocation8 + $0x54] sm:$0xff]
    %v146 = vld [vmem:[#allocation8 + $0x5c] sm:$0xf]
    %v147 = vld [vmem:[#allocation8 + $0x60] sm:$0xff]
    %v148 = vld [vmem:[#allocation8 + $0x68] sm:$0xf]
    %v149 = vld [vmem:[#allocation8 + $0x6c] sm:$0xff]
    %v150 = vld [vmem:[#allocation8 + $0x74] sm:$0xf]
    %v151 = vld [vmem:[#allocation8 + $0x78] sm:$0xff]
    %v152 = vld [vmem:[#allocation8 + $0x80] sm:$0xf]
    %v153 = vld [vmem:[#allocation8 + $0x84] sm:$0xff]
    %v154 = vld [vmem:[#allocation8 + $0x8c] sm:$0xf]
    %v155 = vld [vmem:[#allocation8 + $0x90] sm:$0xff]
    %v156 = vld [vmem:[#allocation8 + $0x98] sm:$0xf]
    %v157 = vld [vmem:[#allocation8 + $0x9c] sm:$0xff]
    %v158 = vld [vmem:[#allocation8 + $0xa4] sm:$0xf]
    %v159 = vld [vmem:[#allocation8 + $0xa8] sm:$0xff]
    %v160 = vld [vmem:[#allocation8 + $0xb0] sm:$0xf]
    %v161 = vld [vmem:[#allocation8 + $0xb4] sm:$0xff]
    %v162 = vld [vmem:[#allocation8 + $0xbc] sm:$0xf]
    %v163 = vld [vmem:[%s5] sm:$0xf]
    %v165 = vlaneseq
    %v166 = vshrl.u32 %v165, 7
    %v167 = vsub.s32 0, %v166
    %v168 = vrot.slane %v98, %v167
    %v170 = vmul.f32 %v168, 0.0
    %171 = vadd.xlane.f32.xlu0 %v170
    %v172 = vpop.xlane.xlu0 %171
    %v173 = vadd.f32 %v97, %v172
    %vm174 = vcmask 64512
    %v175 = vsel %vm174, %v173, -inf
    %176 = vmax.xlane.f32.xlu0 %v175
    %v177 = vpop.xlane.xlu0 %176
    %v178 = vsub.f32 %v173, %v177
    %v179 = vmul.f32 %v178, 1.442695
    %v180 = vpow.pop %v179
    %v181 = vsel %vm174, %v180, 0.0
    %182 = vadd.xlane.f32.xlu0 %v181
    %v183 = vpop.xlane.xlu0 %182
    %v184 = vrcp.pop %v183
    %v185 = vmul.f32 %v180, %v184
    %v186 = vld [vmem:[#allocation2] sm:$0xf]
    %v187 = vld [vmem:[#allocation2 + $0x4] sm:$0xf]
    %v188 = vld [vmem:[#allocation2 + $0x8] sm:$0xf]
    %v189 = vld [vmem:[#allocation2 + $0xc] sm:$0xf]
    %v190 = vld [vmem:[#allocation2 + $0x10] sm:$0xf]
    %v191 = vld [vmem:[#allocation2 + $0x14] sm:$0xf]
    %v192 = vld [vmem:[#allocation2 + $0x18] sm:$0xf]
    %v193 = vld [vmem:[#allocation2 + $0x1c] sm:$0xf]
    %v194 = vunpack.c.l.bf16 %v186
    %v195 = vunpack.c.l.bf16 %v187
    %v196 = vunpack.c.l.bf16 %v188
    %v197 = vunpack.c.l.bf16 %v189
    %v198 = vunpack.c.l.bf16 %v190
    %v199 = vunpack.c.l.bf16 %v191
    %v200 = vunpack.c.l.bf16 %v192
    %v201 = vunpack.c.l.bf16 %v193
    %v202 = vlaneseq
    %v203 = vshrl.u32 %v202, 7
    %v204 = vsub.s32 0, %v203
    %v205 = vrot.slane %v185, %v204
    %207 = vbcast.lane.b32.xlu0 %v205, 256
    %v208 = vpop.permute.xlu0 %207
    %v209 = vlaneseq
    %v210 = vshrl.u32 %v209, 7
    %v211 = vsub.s32 1, %v210
    %v212 = vrot.slane %v185, %v211
    %214 = vbcast.lane.b32.xlu0 %v212, 256
    %v215 = vpop.permute.xlu0 %214
    %v216 = vlaneseq
    %v217 = vshrl.u32 %v216, 7
    %v218 = vsub.s32 2, %v217
    %v219 = vrot.slane %v185, %v218
    %221 = vbcast.lane.b32.xlu0 %v219, 256
    %v222 = vpop.permute.xlu0 %221
    %v223 = vlaneseq
    %v224 = vshrl.u32 %v223, 7
    %v225 = vsub.s32 3, %v224
    %v226 = vrot.slane %v185, %v225
    %228 = vbcast.lane.b32.xlu0 %v226, 256
    %v229 = vpop.permute.xlu0 %228
    %v230 = vlaneseq
    %v231 = vshrl.u32 %v230, 7
    %v232 = vsub.s32 4, %v231
    %v233 = vrot.slane %v185, %v232
    %235 = vbcast.lane.b32.xlu0 %v233, 256
    %v236 = vpop.permute.xlu0 %235
    %v237 = vlaneseq
    %v238 = vshrl.u32 %v237, 7
    %v239 = vsub.s32 5, %v238
    %v240 = vrot.slane %v185, %v239
    %242 = vbcast.lane.b32.xlu0 %v240, 256
    %v243 = vpop.permute.xlu0 %242
    %v244 = vlaneseq
    %v245 = vshrl.u32 %v244, 7
    %v246 = vsub.s32 6, %v245
    %v247 = vrot.slane %v185, %v246
    %249 = vbcast.lane.b32.xlu0 %v247, 256
    %v250 = vpop.permute.xlu0 %249
    %v251 = vlaneseq
    %v252 = vshrl.u32 %v251, 7
    %v253 = vsub.s32 7, %v252
    %v254 = vrot.slane %v185, %v253
    %256 = vbcast.lane.b32.xlu0 %v254, 256
    %v257 = vpop.permute.xlu0 %256
    %v258 = vmul.f32 %v208, %v194
    %v259 = vmul.f32 %v215, %v195
    %v260 = vmul.f32 %v222, %v196
    %v261 = vmul.f32 %v229, %v197
    %v262 = vmul.f32 %v236, %v198
    %v263 = vmul.f32 %v243, %v199
    %v264 = vmul.f32 %v250, %v200
    %v265 = vmul.f32 %v257, %v201
    %v266 = vrot.slane %v258, 4
    %v267 = vadd.f32 %v258, %v266
    %v268 = vrot.slane %v267, 2
    %v269 = vadd.f32 %v267, %v268
    %v270 = vrot.slane %v269, 1
    %v271 = vadd.f32 %v269, %v270
    %v272 = vrot.slane %v259, 4
    %v273 = vadd.f32 %v259, %v272
    %v274 = vrot.slane %v273, 2
    %v275 = vadd.f32 %v273, %v274
    %v276 = vrot.slane %v275, 1
    %v277 = vadd.f32 %v275, %v276
    %v278 = vrot.slane %v260, 4
    %v279 = vadd.f32 %v260, %v278
    %v280 = vrot.slane %v279, 2
    %v281 = vadd.f32 %v279, %v280
    %v282 = vrot.slane %v281, 1
    %v283 = vadd.f32 %v281, %v282
    %v284 = vrot.slane %v261, 4
    %v285 = vadd.f32 %v261, %v284
    %v286 = vrot.slane %v285, 2
    %v287 = vadd.f32 %v285, %v286
    %v288 = vrot.slane %v287, 1
    %v289 = vadd.f32 %v287, %v288
    %v290 = vrot.slane %v262, 4
    %v291 = vadd.f32 %v262, %v290
    %v292 = vrot.slane %v291, 2
    %v293 = vadd.f32 %v291, %v292
    %v294 = vrot.slane %v293, 1
    %v295 = vadd.f32 %v293, %v294
    %v296 = vrot.slane %v263, 4
    %v297 = vadd.f32 %v263, %v296
    %v298 = vrot.slane %v297, 2
    %v299 = vadd.f32 %v297, %v298
    %v300 = vrot.slane %v299, 1
    %v301 = vadd.f32 %v299, %v300
    %v302 = vrot.slane %v264, 4
    %v303 = vadd.f32 %v264, %v302
    %v304 = vrot.slane %v303, 2
    %v305 = vadd.f32 %v303, %v304
    %v306 = vrot.slane %v305, 1
    %v307 = vadd.f32 %v305, %v306
    %v308 = vrot.slane %v265, 4
    %v309 = vadd.f32 %v265, %v308
    %v310 = vrot.slane %v309, 2
    %v311 = vadd.f32 %v309, %v310
    %v312 = vrot.slane %v311, 1
    %v313 = vadd.f32 %v311, %v312
    %v314 = vadd.f32 %v271, 0.0
    %v315 = vadd.f32 %v277, 0.0
    %v316 = vadd.f32 %v283, 0.0
    %v317 = vadd.f32 %v289, 0.0
    %v318 = vadd.f32 %v295, 0.0
    %v319 = vadd.f32 %v301, 0.0
    %v320 = vadd.f32 %v307, 0.0
    %v321 = vadd.f32 %v313, 0.0
    %v322 = vpack.c.bf16 %v314, %v314
    %v323 = vpack.c.bf16 %v315, %v315
    %v324 = vpack.c.bf16 %v316, %v316
    %v325 = vpack.c.bf16 %v317, %v317
    %v326 = vpack.c.bf16 %v318, %v318
    %v327 = vpack.c.bf16 %v319, %v319
    %v328 = vpack.c.bf16 %v320, %v320
    %v329 = vpack.c.bf16 %v321, %v321
    %v338 = vunpack.c.l.b16 %v322
    %v339 = vunpack.c.l.b16 %v323
    %v340 = vunpack.c.l.b16 %v324
    %v341 = vunpack.c.l.b16 %v325
    %v342 = vunpack.c.l.b16 %v326
    %v343 = vunpack.c.l.b16 %v327
    %v344 = vunpack.c.l.b16 %v328
    %v345 = vunpack.c.l.b16 %v329
    %vm346 = vcmask 1041409
    %v347 = vsel %vm346, %v339, %v338
    %vm348 = vcmask 1042434
    %v349 = vsel %vm348, %v340, %v347
    %vm350 = vcmask 1043459
    %v351 = vsel %vm350, %v341, %v349
    %vm352 = vcmask 1044484
    %v353 = vsel %vm352, %v342, %v351
    %vm354 = vcmask 1045509
    %v355 = vsel %vm354, %v343, %v353
    %vm356 = vcmask 1046534
    %v357 = vsel %vm356, %v344, %v355
    %vm358 = vcmask 1047559
    %v359 = vsel %vm358, %v345, %v357
    %v360 = vpack.c.b16 %v359, %v359
    %v394 = vunpack.c.l.b16 %v99
    %v395 = vunpack.c.h.b16 %v99
    %v396 = vunpack.c.l.b16 %v100
    %v397 = vunpack.c.l.b16 %v101
    %v398 = vunpack.c.h.b16 %v101
    %v399 = vunpack.c.l.b16 %v102
    %v400 = vunpack.c.l.b16 %v103
    %v401 = vunpack.c.h.b16 %v103
    %v402 = vunpack.c.l.b16 %v104
    %v403 = vunpack.c.l.b16 %v105
    %v404 = vunpack.c.h.b16 %v105
    %v405 = vunpack.c.l.b16 %v106
    %v406 = vunpack.c.l.b16 %v107
    %v407 = vunpack.c.h.b16 %v107
    %v408 = vunpack.c.l.b16 %v108
    %v409 = vunpack.c.l.b16 %v109
    %v410 = vunpack.c.h.b16 %v109
    %v411 = vunpack.c.l.b16 %v110
    %v412 = vunpack.c.l.b16 %v111
    %v413 = vunpack.c.h.b16 %v111
    %v414 = vunpack.c.l.b16 %v112
    %v415 = vunpack.c.l.b16 %v113
    %v416 = vunpack.c.h.b16 %v113
    %v417 = vunpack.c.l.b16 %v114
    %v418 = vunpack.c.l.b16 %v115
    %v419 = vunpack.c.h.b16 %v115
    %v420 = vunpack.c.l.b16 %v116
    %v421 = vunpack.c.l.b16 %v117
    %v422 = vunpack.c.h.b16 %v117
    %v423 = vunpack.c.l.b16 %v118
    %v424 = vunpack.c.l.b16 %v119
    %v425 = vunpack.c.h.b16 %v119
    %v426 = vunpack.c.l.b16 %v120
    %v427 = vunpack.c.l.b16 %v121
    %v428 = vunpack.c.h.b16 %v121
    %v429 = vunpack.c.l.b16 %v122
    %v430 = vunpack.c.l.b16 %v123
    %v431 = vunpack.c.h.b16 %v123
    %v432 = vunpack.c.l.b16 %v124
    %v433 = vunpack.c.l.b16 %v125
    %v434 = vunpack.c.h.b16 %v125
    %v435 = vunpack.c.l.b16 %v126
    %v436 = vunpack.c.l.b16 %v127
    %v437 = vunpack.c.h.b16 %v127
    %v438 = vunpack.c.l.b16 %v128
    %v439 = vunpack.c.l.b16 %v129
    %v440 = vunpack.c.h.b16 %v129
    %v441 = vunpack.c.l.b16 %v130
    %v442 = vpack.c.b16 %v397, %v394
    %v443 = vpack.c.b16 %v398, %v395
    %v444 = vpack.c.b16 %v399, %v396
    %v445 = vpack.c.b16 %v403, %v400
    %v446 = vpack.c.b16 %v404, %v401
    %v447 = vpack.c.b16 %v405, %v402
    %v448 = vpack.c.b16 %v409, %v406
    %v449 = vpack.c.b16 %v410, %v407
    %v450 = vpack.c.b16 %v411, %v408
    %v451 = vpack.c.b16 %v415, %v412
    %v452 = vpack.c.b16 %v416, %v413
    %v453 = vpack.c.b16 %v417, %v414
    %v454 = vpack.c.b16 %v421, %v418
    %v455 = vpack.c.b16 %v422, %v419
    %v456 = vpack.c.b16 %v423, %v420
    %v457 = vpack.c.b16 %v427, %v424
    %v458 = vpack.c.b16 %v428, %v425
    %v459 = vpack.c.b16 %v429, %v426
    %v460 = vpack.c.b16 %v433, %v430
    %v461 = vpack.c.b16 %v434, %v431
    %v462 = vpack.c.b16 %v435, %v432
    %v463 = vpack.c.b16 %v439, %v436
    %v464 = vpack.c.b16 %v440, %v437
    %v465 = vpack.c.b16 %v441, %v438
    %490 = vmatprep.subr.bf16.mxu0 %v443
    %491 = vmatpush1.bf16.msra.mxu0 %v442
    %492 = vmatprep.subr.bf16.mxu0 %v446
    %493 = vmatpush1.bf16.msra.mxu0 %v445
    %494 = vmatprep.subr.bf16.mxu0 %v449
    %495 = vmatpush1.bf16.msra.mxu0 %v448
    %496 = vmatprep.subr.bf16.mxu0 %v452
    %497 = vmatpush1.bf16.msra.mxu0 %v451
    %498 = vmatprep.subr.bf16.mxu0 %v455
    %499 = vmatpush1.bf16.msra.mxu0 %v454
    %500 = vmatprep.subr.bf16.mxu0 %v458
    %501 = vmatpush1.bf16.msra.mxu0 %v457
    %502 = vmatprep.subr.bf16.mxu0 %v461
    %503 = vmatpush1.bf16.msra.mxu0 %v460
    %504 = vmatprep.subr.bf16.mxu0 %v464
    %505 = vmatpush1.bf16.msra.mxu0 %v463
    %506 = vmatprep.subr.bf16.mxu0 0
    %507 = vmatpush1.bf16.msra.mxu0 0
    %508 = vmatprep.subr.bf16.mxu0 0
    %509 = vmatpush1.bf16.msra.mxu0 0
    %510 = vmatprep.subr.bf16.mxu0 0
    %511 = vmatpush1.bf16.msra.mxu0 0
    %512 = vmatprep.subr.bf16.mxu0 0
    %513 = vmatpush1.bf16.msra.mxu0 0
    %514 = vmatprep.subr.bf16.mxu0 0
    %515 = vmatpush1.bf16.msra.mxu0 0
    %516 = vmatprep.subr.bf16.mxu0 0
    %517 = vmatpush1.bf16.msra.mxu0 0
    %518 = vmatprep.subr.bf16.mxu0 0
    %519 = vmatpush1.bf16.msra.mxu0 0
    %520 = vmatprep.subr.bf16.mxu0 0
    %521 = vmatpush1.bf16.msra.mxu0 0
    %522 = vmatprep.mubr.bf16.mxu0 0
    %523 = vmatmul.mubr.bf16.gmra.mrb[0].mxu0 %v360
    %v524 = vpop.f32.mrb[0].mxu0
    %v525 = vadd.f32 0.0, %v524
    %v526 = vpop.f32.mrb[0].mxu0
    %v527 = vadd.f32 0.0, %v526
    %v528 = vpop.f32.mrb[0].mxu0
    %v529 = vpop.f32.mrb[0].mxu0
    %530 = vdwg.mxu0
    %531 = vmatprep.subr.bf16.mxu0 0
    %532 = vmatpush1.bf16.msra.mxu0 %v444
    %533 = vmatprep.subr.bf16.mxu0 0
    %534 = vmatpush1.bf16.msra.mxu0 %v447
    %535 = vmatprep.subr.bf16.mxu0 0
    %536 = vmatpush1.bf16.msra.mxu0 %v450
    %537 = vmatprep.subr.bf16.mxu0 0
    %538 = vmatpush1.bf16.msra.mxu0 %v453
    %539 = vmatprep.subr.bf16.mxu0 0
    %540 = vmatpush1.bf16.msra.mxu0 %v456
    %541 = vmatprep.subr.bf16.mxu0 0
    %542 = vmatpush1.bf16.msra.mxu0 %v459
    %543 = vmatprep.subr.bf16.mxu0 0
    %544 = vmatpush1.bf16.msra.mxu0 %v462
    %545 = vmatprep.subr.bf16.mxu0 0
    %546 = vmatpush1.bf16.msra.mxu0 %v465
    %547 = vmatprep.subr.bf16.mxu0 0
    %548 = vmatpush1.bf16.msra.mxu0 0
    %549 = vmatprep.subr.bf16.mxu0 0
    %550 = vmatpush1.bf16.msra.mxu0 0
    %551 = vmatprep.subr.bf16.mxu0 0
    %552 = vmatpush1.bf16.msra.mxu0 0
    %553 = vmatprep.subr.bf16.mxu0 0
    %554 = vmatpush1.bf16.msra.mxu0 0
    %555 = vmatprep.subr.bf16.mxu0 0
    %556 = vmatpush1.bf16.msra.mxu0 0
    %557 = vmatprep.subr.bf16.mxu0 0
    %558 = vmatpush1.bf16.msra.mxu0 0
    %559 = vmatprep.subr.bf16.mxu0 0
    %560 = vmatpush1.bf16.msra.mxu0 0
    %561 = vmatprep.subr.bf16.mxu0 0
    %562 = vmatpush1.bf16.msra.mxu0 0
    %563 = vmatprep.mubr.bf16.mxu0 0
    %564 = vmatmul.mubr.bf16.gmra.mrb[0].mxu0 %v360
    %v565 = vpop.f32.mrb[0].mxu0
    %v566 = vadd.f32 0.0, %v565
    %v567 = vpop.f32.mrb[0].mxu0
    %v568 = vpop.f32.mrb[0].mxu0
    %v569 = vpop.f32.mrb[0].mxu0
    %570 = vdwg.mxu0
    %v603 = vunpack.c.l.b16 %v131
    %v604 = vunpack.c.h.b16 %v131
    %v605 = vunpack.c.l.b16 %v132
    %v606 = vunpack.c.l.b16 %v133
    %v607 = vunpack.c.h.b16 %v133
    %v608 = vunpack.c.l.b16 %v134
    %v609 = vunpack.c.l.b16 %v135
    %v610 = vunpack.c.h.b16 %v135
    %v611 = vunpack.c.l.b16 %v136
    %v612 = vunpack.c.l.b16 %v137
    %v613 = vunpack.c.h.b16 %v137
    %v614 = vunpack.c.l.b16 %v138
    %v615 = vunpack.c.l.b16 %v139
    %v616 = vunpack.c.h.b16 %v139
    %v617 = vunpack.c.l.b16 %v140
    %v618 = vunpack.c.l.b16 %v141
    %v619 = vunpack.c.h.b16 %v141
    %v620 = vunpack.c.l.b16 %v142
    %v621 = vunpack.c.l.b16 %v143
    %v622 = vunpack.c.h.b16 %v143
    %v623 = vunpack.c.l.b16 %v144
    %v624 = vunpack.c.l.b16 %v145
    %v625 = vunpack.c.h.b16 %v145
    %v626 = vunpack.c.l.b16 %v146
    %v627 = vunpack.c.l.b16 %v147
    %v628 = vunpack.c.h.b16 %v147
    %v629 = vunpack.c.l.b16 %v148
    %v630 = vunpack.c.l.b16 %v149
    %v631 = vunpack.c.h.b16 %v149
    %v632 = vunpack.c.l.b16 %v150
    %v633 = vunpack.c.l.b16 %v151
    %v634 = vunpack.c.h.b16 %v151
    %v635 = vunpack.c.l.b16 %v152
    %v636 = vunpack.c.l.b16 %v153
    %v637 = vunpack.c.h.b16 %v153
    %v638 = vunpack.c.l.b16 %v154
    %v639 = vunpack.c.l.b16 %v155
    %v640 = vunpack.c.h.b16 %v155
    %v641 = vunpack.c.l.b16 %v156
    %v642 = vunpack.c.l.b16 %v157
    %v643 = vunpack.c.h.b16 %v157
    %v644 = vunpack.c.l.b16 %v158
    %v645 = vunpack.c.l.b16 %v159
    %v646 = vunpack.c.h.b16 %v159
    %v647 = vunpack.c.l.b16 %v160
    %v648 = vunpack.c.l.b16 %v161
    %v649 = vunpack.c.h.b16 %v161
    %v650 = vunpack.c.l.b16 %v162
    %v651 = vpack.c.b16 %v606, %v603
    %v652 = vpack.c.b16 %v607, %v604
    %v653 = vpack.c.b16 %v608, %v605
    %v654 = vpack.c.b16 %v612, %v609
    %v655 = vpack.c.b16 %v613, %v610
    %v656 = vpack.c.b16 %v614, %v611
    %v657 = vpack.c.b16 %v618, %v615
    %v658 = vpack.c.b16 %v619, %v616
    %v659 = vpack.c.b16 %v620, %v617
    %v660 = vpack.c.b16 %v624, %v621
    %v661 = vpack.c.b16 %v625, %v622
    %v662 = vpack.c.b16 %v626, %v623
    %v663 = vpack.c.b16 %v630, %v627
    %v664 = vpack.c.b16 %v631, %v628
    %v665 = vpack.c.b16 %v632, %v629
    %v666 = vpack.c.b16 %v636, %v633
    %v667 = vpack.c.b16 %v637, %v634
    %v668 = vpack.c.b16 %v638, %v635
    %v669 = vpack.c.b16 %v642, %v639
    %v670 = vpack.c.b16 %v643, %v640
    %v671 = vpack.c.b16 %v644, %v641
    %v672 = vpack.c.b16 %v648, %v645
    %v673 = vpack.c.b16 %v649, %v646
    %v674 = vpack.c.b16 %v650, %v647
    %699 = vmatprep.subr.bf16.mxu0 %v652
    %700 = vmatpush1.bf16.msra.mxu0 %v651
    %701 = vmatprep.subr.bf16.mxu0 %v655
    %702 = vmatpush1.bf16.msra.mxu0 %v654
    %703 = vmatprep.subr.bf16.mxu0 %v658
    %704 = vmatpush1.bf16.msra.mxu0 %v657
    %705 = vmatprep.subr.bf16.mxu0 %v661
    %706 = vmatpush1.bf16.msra.mxu0 %v660
    %707 = vmatprep.subr.bf16.mxu0 %v664
    %708 = vmatpush1.bf16.msra.mxu0 %v663
    %709 = vmatprep.subr.bf16.mxu0 %v667
    %710 = vmatpush1.bf16.msra.mxu0 %v666
    %711 = vmatprep.subr.bf16.mxu0 %v670
    %712 = vmatpush1.bf16.msra.mxu0 %v669
    %713 = vmatprep.subr.bf16.mxu0 %v673
    %714 = vmatpush1.bf16.msra.mxu0 %v672
    %715 = vmatprep.subr.bf16.mxu0 0
    %716 = vmatpush1.bf16.msra.mxu0 0
    %717 = vmatprep.subr.bf16.mxu0 0
    %718 = vmatpush1.bf16.msra.mxu0 0
    %719 = vmatprep.subr.bf16.mxu0 0
    %720 = vmatpush1.bf16.msra.mxu0 0
    %721 = vmatprep.subr.bf16.mxu0 0
    %722 = vmatpush1.bf16.msra.mxu0 0
    %723 = vmatprep.subr.bf16.mxu0 0
    %724 = vmatpush1.bf16.msra.mxu0 0
    %725 = vmatprep.subr.bf16.mxu0 0
    %726 = vmatpush1.bf16.msra.mxu0 0
    %727 = vmatprep.subr.bf16.mxu0 0
    %728 = vmatpush1.bf16.msra.mxu0 0
    %729 = vmatprep.subr.bf16.mxu0 0
    %730 = vmatpush1.bf16.msra.mxu0 0
    %731 = vmatprep.mubr.bf16.mxu0 0
    %732 = vmatmul.mubr.bf16.gmra.mrb[0].mxu0 0
    %v733 = vpop.f32.mrb[0].mxu0
    %v734 = vadd.f32 0.0, %v733
    %v735 = vpop.f32.mrb[0].mxu0
    %v736 = vadd.f32 0.0, %v735
    %v737 = vpop.f32.mrb[0].mxu0
    %v738 = vpop.f32.mrb[0].mxu0
    %739 = vdwg.mxu0
    %740 = vmatprep.subr.bf16.mxu0 0
    %741 = vmatpush1.bf16.msra.mxu0 %v653
    %742 = vmatprep.subr.bf16.mxu0 0
    %743 = vmatpush1.bf16.msra.mxu0 %v656
    %744 = vmatprep.subr.bf16.mxu0 0
    %745 = vmatpush1.bf16.msra.mxu0 %v659
    %746 = vmatprep.subr.bf16.mxu0 0
    %747 = vmatpush1.bf16.msra.mxu0 %v662
    %748 = vmatprep.subr.bf16.mxu0 0
    %749 = vmatpush1.bf16.msra.mxu0 %v665
    %750 = vmatprep.subr.bf16.mxu0 0
    %751 = vmatpush1.bf16.msra.mxu0 %v668
    %752 = vmatprep.subr.bf16.mxu0 0
    %753 = vmatpush1.bf16.msra.mxu0 %v671
    %754 = vmatprep.subr.bf16.mxu0 0
    %755 = vmatpush1.bf16.msra.mxu0 %v674
    %756 = vmatprep.subr.bf16.mxu0 0
    %757 = vmatpush1.bf16.msra.mxu0 0
    %758 = vmatprep.subr.bf16.mxu0 0
    %759 = vmatpush1.bf16.msra.mxu0 0
    %760 = vmatprep.subr.bf16.mxu0 0
    %761 = vmatpush1.bf16.msra.mxu0 0
    %762 = vmatprep.subr.bf16.mxu0 0
    %763 = vmatpush1.bf16.msra.mxu0 0
    %764 = vmatprep.subr.bf16.mxu0 0
    %765 = vmatpush1.bf16.msra.mxu0 0
    %766 = vmatprep.subr.bf16.mxu0 0
    %767 = vmatpush1.bf16.msra.mxu0 0
    %768 = vmatprep.subr.bf16.mxu0 0
    %769 = vmatpush1.bf16.msra.mxu0 0
    %770 = vmatprep.subr.bf16.mxu0 0
    %771 = vmatpush1.bf16.msra.mxu0 0
    %772 = vmatprep.mubr.bf16.mxu0 0
    %773 = vmatmul.mubr.bf16.gmra.mrb[0].mxu0 0
    %v774 = vpop.f32.mrb[0].mxu0
    %v775 = vadd.f32 0.0, %v774
    %v776 = vpop.f32.mrb[0].mxu0
    %v777 = vpop.f32.mrb[0].mxu0
    %v778 = vpop.f32.mrb[0].mxu0
    %779 = vdwg.mxu0
    %v780 = vadd.f32 %v525, %v734
    %v781 = vlaneseq
    %v782 = vshrl.u32 %v781, 7
    %v783 = vsub.s32 0, %v782
    %v784 = vrot.slane %v163, %v783
    %v785 = vadd.f32 %v780, %v784
    %v786 = vxor.u32 %v785, 2147483648
    %v787 = vmul.f32 %v786, 1.442695
    %v788 = vpow.pop %v787
    %v789 = vadd.f32 %v788, 1.0
    %v790 = vrcp.pop %v789
    %v791 = vmul.f32 1.0, %v790
    %v792 = vadd.f32 %v527, %v736
    %v793 = vlaneseq
    %v794 = vshrl.u32 %v793, 7
    %v795 = vsub.s32 1, %v794
    %v796 = vrot.slane %v163, %v795
    %v797 = vadd.f32 %v792, %v796
    %v798 = vxor.u32 %v797, 2147483648
    %v799 = vmul.f32 %v798, 1.442695
    %v800 = vpow.pop %v799
    %v801 = vadd.f32 %v800, 1.0
    %v802 = vrcp.pop %v801
    %v803 = vmul.f32 1.0, %v802
    %v804 = vlaneseq
    %v805 = vshrl.u32 %v804, 7
    %v806 = vsub.s32 2, %v805
    %v807 = vrot.slane %v163, %v806
    %v808 = vadd.f32 %v566, %v807
    %v809 = vlaneseq
    %v810 = vshrl.u32 %v809, 7
    %v811 = vsub.s32 3, %v810
    %v812 = vrot.slane %v163, %v811
    %v813 = vadd.f32 %v775, %v812
    %v814 = vmul.f32 %v791, %v813
    %v815 = vadd.f32 %v808, %v814
    %v816 = vtanh.pop %v815
    %v817 = vsub.f32 1.0, %v803
    %v818 = vmul.f32 %v817, %v816
    %v819 = vmul.f32 %v803, 0.0
    %v820 = vadd.f32 %v818, %v819
    %v821 = vmul.f32 %v820, %v168
    %822 = vadd.xlane.f32.xlu0 %v821
    %v823 = vpop.xlane.xlu0 %822
    %v824 = vadd.f32 %v97, %v823
    %v825 = vsel %vm174, %v824, -inf
    %826 = vmax.xlane.f32.xlu0 %v825
    %v827 = vpop.xlane.xlu0 %826
    %v828 = vsub.f32 %v824, %v827
    %v829 = vmul.f32 %v828, 1.442695
    %v830 = vpow.pop %v829
    %v831 = vsel %vm174, %v830, 0.0
    %832 = vadd.xlane.f32.xlu0 %v831
    %v833 = vpop.xlane.xlu0 %832
    %v834 = vrcp.pop %v833
    %v835 = vmul.f32 %v830, %v834
    %v836 = vlaneseq
    %v837 = vshrl.u32 %v836, 7
    %v838 = vsub.s32 0, %v837
    %v839 = vrot.slane %v835, %v838
    %841 = vbcast.lane.b32.xlu0 %v839, 256
    %v842 = vpop.permute.xlu0 %841
    %v843 = vlaneseq
    %v844 = vshrl.u32 %v843, 7
    %v845 = vsub.s32 1, %v844
    %v846 = vrot.slane %v835, %v845
    %848 = vbcast.lane.b32.xlu0 %v846, 256
    %v849 = vpop.permute.xlu0 %848
    %v850 = vlaneseq
    %v851 = vshrl.u32 %v850, 7
    %v852 = vsub.s32 2, %v851
    %v853 = vrot.slane %v835, %v852
    %855 = vbcast.lane.b32.xlu0 %v853, 256
    %v856 = vpop.permute.xlu0 %855
    %v857 = vlaneseq
    %v858 = vshrl.u32 %v857, 7
    %v859 = vsub.s32 3, %v858
    %v860 = vrot.slane %v835, %v859
    %862 = vbcast.lane.b32.xlu0 %v860, 256
    %v863 = vpop.permute.xlu0 %862
    %v864 = vlaneseq
    %v865 = vshrl.u32 %v864, 7
    %v866 = vsub.s32 4, %v865
    %v867 = vrot.slane %v835, %v866
    %869 = vbcast.lane.b32.xlu0 %v867, 256
    %v870 = vpop.permute.xlu0 %869
    %v871 = vlaneseq
    %v872 = vshrl.u32 %v871, 7
    %v873 = vsub.s32 5, %v872
    %v874 = vrot.slane %v835, %v873
    %876 = vbcast.lane.b32.xlu0 %v874, 256
    %v877 = vpop.permute.xlu0 %876
    %v878 = vlaneseq
    %v879 = vshrl.u32 %v878, 7
    %v880 = vsub.s32 6, %v879
    %v881 = vrot.slane %v835, %v880
    %883 = vbcast.lane.b32.xlu0 %v881, 256
    %v884 = vpop.permute.xlu0 %883
    %v885 = vlaneseq
    %v886 = vshrl.u32 %v885, 7
    %v887 = vsub.s32 7, %v886
    %v888 = vrot.slane %v835, %v887
    %890 = vbcast.lane.b32.xlu0 %v888, 256
    %v891 = vpop.permute.xlu0 %890
    %v892 = vmul.f32 %v842, %v194
    %v893 = vmul.f32 %v849, %v195
    %v894 = vmul.f32 %v856, %v196
    %v895 = vmul.f32 %v863, %v197
    %v896 = vmul.f32 %v870, %v198
    %v897 = vmul.f32 %v877, %v199
    %v898 = vmul.f32 %v884, %v200
    %v899 = vmul.f32 %v891, %v201
    %v900 = vrot.slane %v892, 4
    %v901 = vadd.f32 %v892, %v900
    %v902 = vrot.slane %v901, 2
    %v903 = vadd.f32 %v901, %v902
    %v904 = vrot.slane %v903, 1
    %v905 = vadd.f32 %v903, %v904
    %v906 = vrot.slane %v893, 4
    %v907 = vadd.f32 %v893, %v906
    %v908 = vrot.slane %v907, 2
    %v909 = vadd.f32 %v907, %v908
    %v910 = vrot.slane %v909, 1
    %v911 = vadd.f32 %v909, %v910
    %v912 = vrot.slane %v894, 4
    %v913 = vadd.f32 %v894, %v912
    %v914 = vrot.slane %v913, 2
    %v915 = vadd.f32 %v913, %v914
    %v916 = vrot.slane %v915, 1
    %v917 = vadd.f32 %v915, %v916
    %v918 = vrot.slane %v895, 4
    %v919 = vadd.f32 %v895, %v918
    %v920 = vrot.slane %v919, 2
    %v921 = vadd.f32 %v919, %v920
    %v922 = vrot.slane %v921, 1
    %v923 = vadd.f32 %v921, %v922
    %v924 = vrot.slane %v896, 4
    %v925 = vadd.f32 %v896, %v924
    %v926 = vrot.slane %v925, 2
    %v927 = vadd.f32 %v925, %v926
    %v928 = vrot.slane %v927, 1
    %v929 = vadd.f32 %v927, %v928
    %v930 = vrot.slane %v897, 4
    %v931 = vadd.f32 %v897, %v930
    %v932 = vrot.slane %v931, 2
    %v933 = vadd.f32 %v931, %v932
    %v934 = vrot.slane %v933, 1
    %v935 = vadd.f32 %v933, %v934
    %v936 = vrot.slane %v898, 4
    %v937 = vadd.f32 %v898, %v936
    %v938 = vrot.slane %v937, 2
    %v939 = vadd.f32 %v937, %v938
    %v940 = vrot.slane %v939, 1
    %v941 = vadd.f32 %v939, %v940
    %v942 = vrot.slane %v899, 4
    %v943 = vadd.f32 %v899, %v942
    %v944 = vrot.slane %v943, 2
    %v945 = vadd.f32 %v943, %v944
    %v946 = vrot.slane %v945, 1
    %v947 = vadd.f32 %v945, %v946
    %v948 = vadd.f32 %v905, 0.0
    %v949 = vadd.f32 %v911, 0.0
    %v950 = vadd.f32 %v917, 0.0
    %v951 = vadd.f32 %v923, 0.0
    %v952 = vadd.f32 %v929, 0.0
    %v953 = vadd.f32 %v935, 0.0
    %v954 = vadd.f32 %v941, 0.0
    %v955 = vadd.f32 %v947, 0.0
    %v956 = vpack.c.bf16 %v948, %v948
    %v957 = vpack.c.bf16 %v949, %v949
    %v958 = vpack.c.bf16 %v950, %v950
    %v959 = vpack.c.bf16 %v951, %v951
    %v960 = vpack.c.bf16 %v952, %v952
    %v961 = vpack.c.bf16 %v953, %v953
    %v962 = vpack.c.bf16 %v954, %v954
    %v963 = vpack.c.bf16 %v955, %v955
    %v972 = vunpack.c.l.b16 %v956
    %v973 = vunpack.c.l.b16 %v957
    %v974 = vunpack.c.l.b16 %v958
    %v975 = vunpack.c.l.b16 %v959
    %v976 = vunpack.c.l.b16 %v960
    %v977 = vunpack.c.l.b16 %v961
    %v978 = vunpack.c.l.b16 %v962
    %v979 = vunpack.c.l.b16 %v963
    %v980 = vsel %vm346, %v973, %v972
    %v981 = vsel %vm348, %v974, %v980
    %v982 = vsel %vm350, %v975, %v981
    %v983 = vsel %vm352, %v976, %v982
    %v984 = vsel %vm354, %v977, %v983
    %v985 = vsel %vm356, %v978, %v984
    %v986 = vsel %vm358, %v979, %v985
    %v987 = vpack.c.b16 %v986, %v986
    %989 = vmatprep.subr.bf16.mxu0 %v443
    %990 = vmatpush1.bf16.msra.mxu0 %v442
    %991 = vmatprep.subr.bf16.mxu0 %v446
    %992 = vmatpush1.bf16.msra.mxu0 %v445
    %993 = vmatprep.subr.bf16.mxu0 %v449
    %994 = vmatpush1.bf16.msra.mxu0 %v448
    %995 = vmatprep.subr.bf16.mxu0 %v452
    %996 = vmatpush1.bf16.msra.mxu0 %v451
    %997 = vmatprep.subr.bf16.mxu0 %v455
    %998 = vmatpush1.bf16.msra.mxu0 %v454
    %999 = vmatprep.subr.bf16.mxu0 %v458
    %1000 = vmatpush1.bf16.msra.mxu0 %v457
    %1001 = vmatprep.subr.bf16.mxu0 %v461
    %1002 = vmatpush1.bf16.msra.mxu0 %v460
    %1003 = vmatprep.subr.bf16.mxu0 %v464
    %1004 = vmatpush1.bf16.msra.mxu0 %v463
    %1005 = vmatprep.subr.bf16.mxu0 0
    %1006 = vmatpush1.bf16.msra.mxu0 0
    %1007 = vmatprep.subr.bf16.mxu0 0
    %1008 = vmatpush1.bf16.msra.mxu0 0
    %1009 = vmatprep.subr.bf16.mxu0 0
    %1010 = vmatpush1.bf16.msra.mxu0 0
    %1011 = vmatprep.subr.bf16.mxu0 0
    %1012 = vmatpush1.bf16.msra.mxu0 0
    %1013 = vmatprep.subr.bf16.mxu0 0
    %1014 = vmatpush1.bf16.msra.mxu0 0
    %1015 = vmatprep.subr.bf16.mxu0 0
    %1016 = vmatpush1.bf16.msra.mxu0 0
    %1017 = vmatprep.subr.bf16.mxu0 0
    %1018 = vmatpush1.bf16.msra.mxu0 0
    %1019 = vmatprep.subr.bf16.mxu0 0
    %1020 = vmatpush1.bf16.msra.mxu0 0
    %1021 = vmatprep.mubr.bf16.mxu0 0
    %1022 = vmatmul.mubr.bf16.gmra.mrb[0].mxu0 %v987
    %v1023 = vpop.f32.mrb[0].mxu0
    %v1024 = vadd.f32 0.0, %v1023
    %v1025 = vpop.f32.mrb[0].mxu0
    %v1026 = vadd.f32 0.0, %v1025
    %v1027 = vpop.f32.mrb[0].mxu0
    %v1028 = vpop.f32.mrb[0].mxu0
    %1029 = vdwg.mxu0
    %1030 = vmatprep.subr.bf16.mxu0 0
    %1031 = vmatpush1.bf16.msra.mxu0 %v444
    %1032 = vmatprep.subr.bf16.mxu0 0
    %1033 = vmatpush1.bf16.msra.mxu0 %v447
    %1034 = vmatprep.subr.bf16.mxu0 0
    %1035 = vmatpush1.bf16.msra.mxu0 %v450
    %1036 = vmatprep.subr.bf16.mxu0 0
    %1037 = vmatpush1.bf16.msra.mxu0 %v453
    %1038 = vmatprep.subr.bf16.mxu0 0
    %1039 = vmatpush1.bf16.msra.mxu0 %v456
    %1040 = vmatprep.subr.bf16.mxu0 0
    %1041 = vmatpush1.bf16.msra.mxu0 %v459
    %1042 = vmatprep.subr.bf16.mxu0 0
    %1043 = vmatpush1.bf16.msra.mxu0 %v462
    %1044 = vmatprep.subr.bf16.mxu0 0
    %1045 = vmatpush1.bf16.msra.mxu0 %v465
    %1046 = vmatprep.subr.bf16.mxu0 0
    %1047 = vmatpush1.bf16.msra.mxu0 0
    %1048 = vmatprep.subr.bf16.mxu0 0
    %1049 = vmatpush1.bf16.msra.mxu0 0
    %1050 = vmatprep.subr.bf16.mxu0 0
    %1051 = vmatpush1.bf16.msra.mxu0 0
    %1052 = vmatprep.subr.bf16.mxu0 0
    %1053 = vmatpush1.bf16.msra.mxu0 0
    %1054 = vmatprep.subr.bf16.mxu0 0
    %1055 = vmatpush1.bf16.msra.mxu0 0
    %1056 = vmatprep.subr.bf16.mxu0 0
    %1057 = vmatpush1.bf16.msra.mxu0 0
    %1058 = vmatprep.subr.bf16.mxu0 0
    %1059 = vmatpush1.bf16.msra.mxu0 0
    %1060 = vmatprep.subr.bf16.mxu0 0
    %1061 = vmatpush1.bf16.msra.mxu0 0
    %1062 = vmatprep.mubr.bf16.mxu0 0
    %1063 = vmatmul.mubr.bf16.gmra.mrb[0].mxu0 %v987
    %v1064 = vpop.f32.mrb[0].mxu0
    %v1065 = vadd.f32 0.0, %v1064
    %v1066 = vpop.f32.mrb[0].mxu0
    %v1067 = vpop.f32.mrb[0].mxu0
    %v1068 = vpop.f32.mrb[0].mxu0
    %1069 = vdwg.mxu0
    %v1070 = vpack.c.bf16 %v820, %v820
    %1071 = vmatprep.subr.bf16.mxu0 %v652
    %1072 = vmatpush1.bf16.msra.mxu0 %v651
    %1073 = vmatprep.subr.bf16.mxu0 %v655
    %1074 = vmatpush1.bf16.msra.mxu0 %v654
    %1075 = vmatprep.subr.bf16.mxu0 %v658
    %1076 = vmatpush1.bf16.msra.mxu0 %v657
    %1077 = vmatprep.subr.bf16.mxu0 %v661
    %1078 = vmatpush1.bf16.msra.mxu0 %v660
    %1079 = vmatprep.subr.bf16.mxu0 %v664
    %1080 = vmatpush1.bf16.msra.mxu0 %v663
    %1081 = vmatprep.subr.bf16.mxu0 %v667
    %1082 = vmatpush1.bf16.msra.mxu0 %v666
    %1083 = vmatprep.subr.bf16.mxu0 %v670
    %1084 = vmatpush1.bf16.msra.mxu0 %v669
    %1085 = vmatprep.subr.bf16.mxu0 %v673
    %1086 = vmatpush1.bf16.msra.mxu0 %v672
    %1087 = vmatprep.subr.bf16.mxu0 0
    %1088 = vmatpush1.bf16.msra.mxu0 0
    %1089 = vmatprep.subr.bf16.mxu0 0
    %1090 = vmatpush1.bf16.msra.mxu0 0
    %1091 = vmatprep.subr.bf16.mxu0 0
    %1092 = vmatpush1.bf16.msra.mxu0 0
    %1093 = vmatprep.subr.bf16.mxu0 0
    %1094 = vmatpush1.bf16.msra.mxu0 0
    %1095 = vmatprep.subr.bf16.mxu0 0
    %1096 = vmatpush1.bf16.msra.mxu0 0
    %1097 = vmatprep.subr.bf16.mxu0 0
    %1098 = vmatpush1.bf16.msra.mxu0 0
    %1099 = vmatprep.subr.bf16.mxu0 0
    %1100 = vmatpush1.bf16.msra.mxu0 0
    %1101 = vmatprep.subr.bf16.mxu0 0
    %1102 = vmatpush1.bf16.msra.mxu0 0
    %1103 = vmatprep.mubr.bf16.mxu0 0
    %1104 = vmatmul.mubr.bf16.gmra.mrb[0].mxu0 %v1070
    %v1105 = vpop.f32.mrb[0].mxu0
    %v1106 = vadd.f32 0.0, %v1105
    %v1107 = vpop.f32.mrb[0].mxu0
    %v1108 = vadd.f32 0.0, %v1107
    %v1109 = vpop.f32.mrb[0].mxu0
    %v1110 = vpop.f32.mrb[0].mxu0
    %1111 = vdwg.mxu0
    %1112 = vmatprep.subr.bf16.mxu0 0
    %1113 = vmatpush1.bf16.msra.mxu0 %v653
    %1114 = vmatprep.subr.bf16.mxu0 0
    %1115 = vmatpush1.bf16.msra.mxu0 %v656
    %1116 = vmatprep.subr.bf16.mxu0 0
    %1117 = vmatpush1.bf16.msra.mxu0 %v659
    %1118 = vmatprep.subr.bf16.mxu0 0
    %1119 = vmatpush1.bf16.msra.mxu0 %v662
    %1120 = vmatprep.subr.bf16.mxu0 0
    %1121 = vmatpush1.bf16.msra.mxu0 %v665
    %1122 = vmatprep.subr.bf16.mxu0 0
    %1123 = vmatpush1.bf16.msra.mxu0 %v668
    %1124 = vmatprep.subr.bf16.mxu0 0
    %1125 = vmatpush1.bf16.msra.mxu0 %v671
    %1126 = vmatprep.subr.bf16.mxu0 0
    %1127 = vmatpush1.bf16.msra.mxu0 %v674
    %1128 = vmatprep.subr.bf16.mxu0 0
    %1129 = vmatpush1.bf16.msra.mxu0 0
    %1130 = vmatprep.subr.bf16.mxu0 0
    %1131 = vmatpush1.bf16.msra.mxu0 0
    %1132 = vmatprep.subr.bf16.mxu0 0
    %1133 = vmatpush1.bf16.msra.mxu0 0
    %1134 = vmatprep.subr.bf16.mxu0 0
    %1135 = vmatpush1.bf16.msra.mxu0 0
    %1136 = vmatprep.subr.bf16.mxu0 0
    %1137 = vmatpush1.bf16.msra.mxu0 0
    %1138 = vmatprep.subr.bf16.mxu0 0
    %1139 = vmatpush1.bf16.msra.mxu0 0
    %1140 = vmatprep.subr.bf16.mxu0 0
    %1141 = vmatpush1.bf16.msra.mxu0 0
    %1142 = vmatprep.subr.bf16.mxu0 0
    %1143 = vmatpush1.bf16.msra.mxu0 0
    %1144 = vmatprep.mubr.bf16.mxu0 0
    %1145 = vmatmul.mubr.bf16.gmra.mrb[0].mxu0 %v1070
    %v1146 = vpop.f32.mrb[0].mxu0
    %v1147 = vadd.f32 0.0, %v1146
    %v1148 = vpop.f32.mrb[0].mxu0
    %v1149 = vpop.f32.mrb[0].mxu0
    %v1150 = vpop.f32.mrb[0].mxu0
    %1151 = vdwg.mxu0
    %v1152 = vadd.f32 %v1024, %v1106
    %v1153 = vadd.f32 %v1152, %v784
    %v1154 = vxor.u32 %v1153, 2147483648
    %v1155 = vmul.f32 %v1154, 1.442695
    %v1156 = vpow.pop %v1155
    %v1157 = vadd.f32 %v1156, 1.0
    %v1158 = vrcp.pop %v1157
    %v1159 = vmul.f32 1.0, %v1158
    %v1160 = vadd.f32 %v1026, %v1108
    %v1161 = vadd.f32 %v1160, %v796
    %v1162 = vxor.u32 %v1161, 2147483648
    %v1163 = vmul.f32 %v1162, 1.442695
    %v1164 = vpow.pop %v1163
    %v1165 = vadd.f32 %v1164, 1.0
    %v1166 = vrcp.pop %v1165
    %v1167 = vmul.f32 1.0, %v1166
    %v1168 = vadd.f32 %v1065, %v807
    %v1169 = vadd.f32 %v1147, %v812
    %v1170 = vmul.f32 %v1159, %v1169
    %v1171 = vadd.f32 %v1168, %v1170
    %v1172 = vtanh.pop %v1171
    %v1173 = vsub.f32 1.0, %v1167
    %v1174 = vmul.f32 %v1173, %v1172
    %v1175 = vmul.f32 %v1167, %v820
    %v1176 = vadd.f32 %v1174, %v1175
    %v1177 = vmul.f32 %v1176, %v168
    %1178 = vadd.xlane.f32.xlu0 %v1177
    %v1179 = vpop.xlane.xlu0 %1178
    %v1180 = vadd.f32 %v97, %v1179
    %v1181 = vsel %vm174, %v1180, -inf
    %1182 = vmax.xlane.f32.xlu0 %v1181
    %v1183 = vpop.xlane.xlu0 %1182
    %v1184 = vsub.f32 %v1180, %v1183
    %v1185 = vmul.f32 %v1184, 1.442695
    %v1186 = vpow.pop %v1185
    %v1187 = vsel %vm174, %v1186, 0.0
    %1188 = vadd.xlane.f32.xlu0 %v1187
    %v1189 = vpop.xlane.xlu0 %1188
    %v1190 = vrcp.pop %v1189
    %v1191 = vmul.f32 %v1186, %v1190
    %v1192 = vlaneseq
    %v1193 = vshrl.u32 %v1192, 7
    %v1194 = vsub.s32 0, %v1193
    %v1195 = vrot.slane %v1191, %v1194
    %1197 = vbcast.lane.b32.xlu0 %v1195, 256
    %v1198 = vpop.permute.xlu0 %1197
    %v1199 = vlaneseq
    %v1200 = vshrl.u32 %v1199, 7
    %v1201 = vsub.s32 1, %v1200
    %v1202 = vrot.slane %v1191, %v1201
    %1204 = vbcast.lane.b32.xlu0 %v1202, 256
    %v1205 = vpop.permute.xlu0 %1204
    %v1206 = vlaneseq
    %v1207 = vshrl.u32 %v1206, 7
    %v1208 = vsub.s32 2, %v1207
    %v1209 = vrot.slane %v1191, %v1208
    %1211 = vbcast.lane.b32.xlu0 %v1209, 256
    %v1212 = vpop.permute.xlu0 %1211
    %v1213 = vlaneseq
    %v1214 = vshrl.u32 %v1213, 7
    %v1215 = vsub.s32 3, %v1214
    %v1216 = vrot.slane %v1191, %v1215
    %1218 = vbcast.lane.b32.xlu0 %v1216, 256
    %v1219 = vpop.permute.xlu0 %1218
    %v1220 = vlaneseq
    %v1221 = vshrl.u32 %v1220, 7
    %v1222 = vsub.s32 4, %v1221
    %v1223 = vrot.slane %v1191, %v1222
    %1225 = vbcast.lane.b32.xlu0 %v1223, 256
    %v1226 = vpop.permute.xlu0 %1225
    %v1227 = vlaneseq
    %v1228 = vshrl.u32 %v1227, 7
    %v1229 = vsub.s32 5, %v1228
    %v1230 = vrot.slane %v1191, %v1229
    %1232 = vbcast.lane.b32.xlu0 %v1230, 256
    %v1233 = vpop.permute.xlu0 %1232
    %v1234 = vlaneseq
    %v1235 = vshrl.u32 %v1234, 7
    %v1236 = vsub.s32 6, %v1235
    %v1237 = vrot.slane %v1191, %v1236
    %1239 = vbcast.lane.b32.xlu0 %v1237, 256
    %v1240 = vpop.permute.xlu0 %1239
    %v1241 = vlaneseq
    %v1242 = vshrl.u32 %v1241, 7
    %v1243 = vsub.s32 7, %v1242
    %v1244 = vrot.slane %v1191, %v1243
    %1246 = vbcast.lane.b32.xlu0 %v1244, 256
    %v1247 = vpop.permute.xlu0 %1246
    %v1248 = vmul.f32 %v1198, %v194
    %v1249 = vmul.f32 %v1205, %v195
    %v1250 = vmul.f32 %v1212, %v196
    %v1251 = vmul.f32 %v1219, %v197
    %v1252 = vmul.f32 %v1226, %v198
    %v1253 = vmul.f32 %v1233, %v199
    %v1254 = vmul.f32 %v1240, %v200
    %v1255 = vmul.f32 %v1247, %v201
    %v1256 = vrot.slane %v1248, 4
    %v1257 = vadd.f32 %v1248, %v1256
    %v1258 = vrot.slane %v1257, 2
    %v1259 = vadd.f32 %v1257, %v1258
    %v1260 = vrot.slane %v1259, 1
    %v1261 = vadd.f32 %v1259, %v1260
    %v1262 = vrot.slane %v1249, 4
    %v1263 = vadd.f32 %v1249, %v1262
    %v1264 = vrot.slane %v1263, 2
    %v1265 = vadd.f32 %v1263, %v1264
    %v1266 = vrot.slane %v1265, 1
    %v1267 = vadd.f32 %v1265, %v1266
    %v1268 = vrot.slane %v1250, 4
    %v1269 = vadd.f32 %v1250, %v1268
    %v1270 = vrot.slane %v1269, 2
    %v1271 = vadd.f32 %v1269, %v1270
    %v1272 = vrot.slane %v1271, 1
    %v1273 = vadd.f32 %v1271, %v1272
    %v1274 = vrot.slane %v1251, 4
    %v1275 = vadd.f32 %v1251, %v1274
    %v1276 = vrot.slane %v1275, 2
    %v1277 = vadd.f32 %v1275, %v1276
    %v1278 = vrot.slane %v1277, 1
    %v1279 = vadd.f32 %v1277, %v1278
    %v1280 = vrot.slane %v1252, 4
    %v1281 = vadd.f32 %v1252, %v1280
    %v1282 = vrot.slane %v1281, 2
    %v1283 = vadd.f32 %v1281, %v1282
    %v1284 = vrot.slane %v1283, 1
    %v1285 = vadd.f32 %v1283, %v1284
    %v1286 = vrot.slane %v1253, 4
    %v1287 = vadd.f32 %v1253, %v1286
    %v1288 = vrot.slane %v1287, 2
    %v1289 = vadd.f32 %v1287, %v1288
    %v1290 = vrot.slane %v1289, 1
    %v1291 = vadd.f32 %v1289, %v1290
    %v1292 = vrot.slane %v1254, 4
    %v1293 = vadd.f32 %v1254, %v1292
    %v1294 = vrot.slane %v1293, 2
    %v1295 = vadd.f32 %v1293, %v1294
    %v1296 = vrot.slane %v1295, 1
    %v1297 = vadd.f32 %v1295, %v1296
    %v1298 = vrot.slane %v1255, 4
    %v1299 = vadd.f32 %v1255, %v1298
    %v1300 = vrot.slane %v1299, 2
    %v1301 = vadd.f32 %v1299, %v1300
    %v1302 = vrot.slane %v1301, 1
    %v1303 = vadd.f32 %v1301, %v1302
    %v1304 = vadd.f32 %v1261, 0.0
    %v1305 = vadd.f32 %v1267, 0.0
    %v1306 = vadd.f32 %v1273, 0.0
    %v1307 = vadd.f32 %v1279, 0.0
    %v1308 = vadd.f32 %v1285, 0.0
    %v1309 = vadd.f32 %v1291, 0.0
    %v1310 = vadd.f32 %v1297, 0.0
    %v1311 = vadd.f32 %v1303, 0.0
    %v1312 = vpack.c.bf16 %v1304, %v1304
    %v1313 = vpack.c.bf16 %v1305, %v1305
    %v1314 = vpack.c.bf16 %v1306, %v1306
    %v1315 = vpack.c.bf16 %v1307, %v1307
    %v1316 = vpack.c.bf16 %v1308, %v1308
    %v1317 = vpack.c.bf16 %v1309, %v1309
    %v1318 = vpack.c.bf16 %v1310, %v1310
    %v1319 = vpack.c.bf16 %v1311, %v1311
    %v1328 = vunpack.c.l.b16 %v1312
    %v1329 = vunpack.c.l.b16 %v1313
    %v1330 = vunpack.c.l.b16 %v1314
    %v1331 = vunpack.c.l.b16 %v1315
    %v1332 = vunpack.c.l.b16 %v1316
    %v1333 = vunpack.c.l.b16 %v1317
    %v1334 = vunpack.c.l.b16 %v1318
    %v1335 = vunpack.c.l.b16 %v1319
    %v1336 = vsel %vm346, %v1329, %v1328
    %v1337 = vsel %vm348, %v1330, %v1336
    %v1338 = vsel %vm350, %v1331, %v1337
    %v1339 = vsel %vm352, %v1332, %v1338
    %v1340 = vsel %vm354, %v1333, %v1339
    %v1341 = vsel %vm356, %v1334, %v1340
    %v1342 = vsel %vm358, %v1335, %v1341
    %v1343 = vpack.c.b16 %v1342, %v1342
    %1345 = vmatprep.subr.bf16.mxu0 %v443
    %1346 = vmatpush1.bf16.msra.mxu0 %v442
    %1347 = vmatprep.subr.bf16.mxu0 %v446
    %1348 = vmatpush1.bf16.msra.mxu0 %v445
    %1349 = vmatprep.subr.bf16.mxu0 %v449
    %1350 = vmatpush1.bf16.msra.mxu0 %v448
    %1351 = vmatprep.subr.bf16.mxu0 %v452
    %1352 = vmatpush1.bf16.msra.mxu0 %v451
    %1353 = vmatprep.subr.bf16.mxu0 %v455
    %1354 = vmatpush1.bf16.msra.mxu0 %v454
    %1355 = vmatprep.subr.bf16.mxu0 %v458
    %1356 = vmatpush1.bf16.msra.mxu0 %v457
    %1357 = vmatprep.subr.bf16.mxu0 %v461
    %1358 = vmatpush1.bf16.msra.mxu0 %v460
    %1359 = vmatprep.subr.bf16.mxu0 %v464
    %1360 = vmatpush1.bf16.msra.mxu0 %v463
    %1361 = vmatprep.subr.bf16.mxu0 0
    %1362 = vmatpush1.bf16.msra.mxu0 0
    %1363 = vmatprep.subr.bf16.mxu0 0
    %1364 = vmatpush1.bf16.msra.mxu0 0
    %1365 = vmatprep.subr.bf16.mxu0 0
    %1366 = vmatpush1.bf16.msra.mxu0 0
    %1367 = vmatprep.subr.bf16.mxu0 0
    %1368 = vmatpush1.bf16.msra.mxu0 0
    %1369 = vmatprep.subr.bf16.mxu0 0
    %1370 = vmatpush1.bf16.msra.mxu0 0
    %1371 = vmatprep.subr.bf16.mxu0 0
    %1372 = vmatpush1.bf16.msra.mxu0 0
    %1373 = vmatprep.subr.bf16.mxu0 0
    %1374 = vmatpush1.bf16.msra.mxu0 0
    %1375 = vmatprep.subr.bf16.mxu0 0
    %1376 = vmatpush1.bf16.msra.mxu0 0
    %1377 = vmatprep.mubr.bf16.mxu0 0
    %1378 = vmatmul.mubr.bf16.gmra.mrb[0].mxu0 %v1343
    %v1379 = vpop.f32.mrb[0].mxu0
    %v1380 = vadd.f32 0.0, %v1379
    %v1381 = vpop.f32.mrb[0].mxu0
    %v1382 = vadd.f32 0.0, %v1381
    %v1383 = vpop.f32.mrb[0].mxu0
    %v1384 = vpop.f32.mrb[0].mxu0
    %1385 = vdwg.mxu0
    %1386 = vmatprep.subr.bf16.mxu0 0
    %1387 = vmatpush1.bf16.msra.mxu0 %v444
    %1388 = vmatprep.subr.bf16.mxu0 0
    %1389 = vmatpush1.bf16.msra.mxu0 %v447
    %1390 = vmatprep.subr.bf16.mxu0 0
    %1391 = vmatpush1.bf16.msra.mxu0 %v450
    %1392 = vmatprep.subr.bf16.mxu0 0
    %1393 = vmatpush1.bf16.msra.mxu0 %v453
    %1394 = vmatprep.subr.bf16.mxu0 0
    %1395 = vmatpush1.bf16.msra.mxu0 %v456
    %1396 = vmatprep.subr.bf16.mxu0 0
    %1397 = vmatpush1.bf16.msra.mxu0 %v459
    %1398 = vmatprep.subr.bf16.mxu0 0
    %1399 = vmatpush1.bf16.msra.mxu0 %v462
    %1400 = vmatprep.subr.bf16.mxu0 0
    %1401 = vmatpush1.bf16.msra.mxu0 %v465
    %1402 = vmatprep.subr.bf16.mxu0 0
    %1403 = vmatpush1.bf16.msra.mxu0 0
    %1404 = vmatprep.subr.bf16.mxu0 0
    %1405 = vmatpush1.bf16.msra.mxu0 0
    %1406 = vmatprep.subr.bf16.mxu0 0
    %1407 = vmatpush1.bf16.msra.mxu0 0
    %1408 = vmatprep.subr.bf16.mxu0 0
    %1409 = vmatpush1.bf16.msra.mxu0 0
    %1410 = vmatprep.subr.bf16.mxu0 0
    %1411 = vmatpush1.bf16.msra.mxu0 0
    %1412 = vmatprep.subr.bf16.mxu0 0
    %1413 = vmatpush1.bf16.msra.mxu0 0
    %1414 = vmatprep.subr.bf16.mxu0 0
    %1415 = vmatpush1.bf16.msra.mxu0 0
    %1416 = vmatprep.subr.bf16.mxu0 0
    %1417 = vmatpush1.bf16.msra.mxu0 0
    %1418 = vmatprep.mubr.bf16.mxu0 0
    %1419 = vmatmul.mubr.bf16.gmra.mrb[0].mxu0 %v1343
    %v1420 = vpop.f32.mrb[0].mxu0
    %v1421 = vadd.f32 0.0, %v1420
    %v1422 = vpop.f32.mrb[0].mxu0
    %v1423 = vpop.f32.mrb[0].mxu0
    %v1424 = vpop.f32.mrb[0].mxu0
    %1425 = vdwg.mxu0
    %v1426 = vpack.c.bf16 %v1176, %v1176
    %1427 = vmatprep.subr.bf16.mxu0 %v652
    %1428 = vmatpush1.bf16.msra.mxu0 %v651
    %1429 = vmatprep.subr.bf16.mxu0 %v655
    %1430 = vmatpush1.bf16.msra.mxu0 %v654
    %1431 = vmatprep.subr.bf16.mxu0 %v658
    %1432 = vmatpush1.bf16.msra.mxu0 %v657
    %1433 = vmatprep.subr.bf16.mxu0 %v661
    %1434 = vmatpush1.bf16.msra.mxu0 %v660
    %1435 = vmatprep.subr.bf16.mxu0 %v664
    %1436 = vmatpush1.bf16.msra.mxu0 %v663
    %1437 = vmatprep.subr.bf16.mxu0 %v667
    %1438 = vmatpush1.bf16.msra.mxu0 %v666
    %1439 = vmatprep.subr.bf16.mxu0 %v670
    %1440 = vmatpush1.bf16.msra.mxu0 %v669
    %1441 = vmatprep.subr.bf16.mxu0 %v673
    %1442 = vmatpush1.bf16.msra.mxu0 %v672
    %1443 = vmatprep.subr.bf16.mxu0 0
    %1444 = vmatpush1.bf16.msra.mxu0 0
    %1445 = vmatprep.subr.bf16.mxu0 0
    %1446 = vmatpush1.bf16.msra.mxu0 0
    %1447 = vmatprep.subr.bf16.mxu0 0
    %1448 = vmatpush1.bf16.msra.mxu0 0
    %1449 = vmatprep.subr.bf16.mxu0 0
    %1450 = vmatpush1.bf16.msra.mxu0 0
    %1451 = vmatprep.subr.bf16.mxu0 0
    %1452 = vmatpush1.bf16.msra.mxu0 0
    %1453 = vmatprep.subr.bf16.mxu0 0
    %1454 = vmatpush1.bf16.msra.mxu0 0
    %1455 = vmatprep.subr.bf16.mxu0 0
    %1456 = vmatpush1.bf16.msra.mxu0 0
    %1457 = vmatprep.subr.bf16.mxu0 0
    %1458 = vmatpush1.bf16.msra.mxu0 0
    %1459 = vmatprep.mubr.bf16.mxu0 0
    %1460 = vmatmul.mubr.bf16.gmra.mrb[0].mxu0 %v1426
    %v1461 = vpop.f32.mrb[0].mxu0
    %v1462 = vadd.f32 0.0, %v1461
    %v1463 = vpop.f32.mrb[0].mxu0
    %v1464 = vadd.f32 0.0, %v1463
    %v1465 = vpop.f32.mrb[0].mxu0
    %v1466 = vpop.f32.mrb[0].mxu0
    %1467 = vdwg.mxu0
    %1468 = vmatprep.subr.bf16.mxu0 0
    %1469 = vmatpush1.bf16.msra.mxu0 %v653
    %1470 = vmatprep.subr.bf16.mxu0 0
    %1471 = vmatpush1.bf16.msra.mxu0 %v656
    %1472 = vmatprep.subr.bf16.mxu0 0
    %1473 = vmatpush1.bf16.msra.mxu0 %v659
    %1474 = vmatprep.subr.bf16.mxu0 0
    %1475 = vmatpush1.bf16.msra.mxu0 %v662
    %1476 = vmatprep.subr.bf16.mxu0 0
    %1477 = vmatpush1.bf16.msra.mxu0 %v665
    %1478 = vmatprep.subr.bf16.mxu0 0
    %1479 = vmatpush1.bf16.msra.mxu0 %v668
    %1480 = vmatprep.subr.bf16.mxu0 0
    %1481 = vmatpush1.bf16.msra.mxu0 %v671
    %1482 = vmatprep.subr.bf16.mxu0 0
    %1483 = vmatpush1.bf16.msra.mxu0 %v674
    %1484 = vmatprep.subr.bf16.mxu0 0
    %1485 = vmatpush1.bf16.msra.mxu0 0
    %1486 = vmatprep.subr.bf16.mxu0 0
    %1487 = vmatpush1.bf16.msra.mxu0 0
    %1488 = vmatprep.subr.bf16.mxu0 0
    %1489 = vmatpush1.bf16.msra.mxu0 0
    %1490 = vmatprep.subr.bf16.mxu0 0
    %1491 = vmatpush1.bf16.msra.mxu0 0
    %1492 = vmatprep.subr.bf16.mxu0 0
    %1493 = vmatpush1.bf16.msra.mxu0 0
    %1494 = vmatprep.subr.bf16.mxu0 0
    %1495 = vmatpush1.bf16.msra.mxu0 0
    %1496 = vmatprep.subr.bf16.mxu0 0
    %1497 = vmatpush1.bf16.msra.mxu0 0
    %1498 = vmatprep.subr.bf16.mxu0 0
    %1499 = vmatpush1.bf16.msra.mxu0 0
    %1500 = vmatprep.mubr.bf16.mxu0 0
    %1501 = vmatmul.mubr.bf16.gmra.mrb[0].mxu0 %v1426
    %v1502 = vpop.f32.mrb[0].mxu0
    %v1503 = vadd.f32 0.0, %v1502
    %v1504 = vpop.f32.mrb[0].mxu0
    %v1505 = vpop.f32.mrb[0].mxu0
    %v1506 = vpop.f32.mrb[0].mxu0
    %1507 = vdwg.mxu0
    %v1508 = vadd.f32 %v1380, %v1462
    %v1509 = vadd.f32 %v1508, %v784
    %v1510 = vxor.u32 %v1509, 2147483648
    %v1511 = vmul.f32 %v1510, 1.442695
    %v1512 = vpow.pop %v1511
    %v1513 = vadd.f32 %v1512, 1.0
    %v1514 = vrcp.pop %v1513
    %v1515 = vmul.f32 1.0, %v1514
    %v1516 = vadd.f32 %v1382, %v1464
    %v1517 = vadd.f32 %v1516, %v796
    %v1518 = vxor.u32 %v1517, 2147483648
    %v1519 = vmul.f32 %v1518, 1.442695
    %v1520 = vpow.pop %v1519
    %v1521 = vadd.f32 %v1520, 1.0
    %v1522 = vrcp.pop %v1521
    %v1523 = vmul.f32 1.0, %v1522
    %v1524 = vadd.f32 %v1421, %v807
    %v1525 = vadd.f32 %v1503, %v812
    %v1526 = vmul.f32 %v1515, %v1525
    %v1527 = vadd.f32 %v1524, %v1526
    %v1528 = vtanh.pop %v1527
    %v1529 = vsub.f32 1.0, %v1523
    %v1530 = vmul.f32 %v1529, %v1528
    %v1531 = vmul.f32 %v1523, %v1176
    %v1532 = vadd.f32 %v1530, %v1531
    %v1533 = vld [vmem:[#allocation10] sm:$0xf]
    %v1534 = vld [vmem:[#allocation10 + $0x4] sm:$0xf]
    %v1535 = vld [vmem:[#allocation10 + $0x8] sm:$0xf]
    %v1536 = vld [vmem:[#allocation10 + $0xc] sm:$0xf]
    %v1537 = vld [vmem:[#allocation10 + $0x10] sm:$0xf]
    %v1538 = vld [vmem:[#allocation10 + $0x14] sm:$0xf]
    %v1539 = vld [vmem:[#allocation10 + $0x18] sm:$0xf]
    %v1540 = vld [vmem:[#allocation10 + $0x1c] sm:$0xf]
    %v1541 = vld [vmem:[#allocation10 + $0x20] sm:$0xf]
    %v1542 = vld [vmem:[#allocation10 + $0x24] sm:$0xf]
    %v1543 = vld [vmem:[#allocation10 + $0x28] sm:$0xf]
    %v1544 = vld [vmem:[#allocation10 + $0x2c] sm:$0xf]
    %v1545 = vld [vmem:[#allocation10 + $0x30] sm:$0xf]
    %v1546 = vld [vmem:[#allocation10 + $0x34] sm:$0xf]
    %v1547 = vld [vmem:[#allocation10 + $0x38] sm:$0xf]
    %v1548 = vld [vmem:[#allocation10 + $0x3c] sm:$0xf]
    %v1549 = vpack.c.bf16 %v1532, %v1532
    %v1550 = vld [vmem:[%s7] sm:$0x1]
    %v1552 = vlaneseq
    %v1553 = vshrl.u32 %v1552, 7
    %v1554 = vsub.s32 0, %v1553
    %v1555 = vrot.slane %v1550, %v1554
    %v1573 = vunpack.c.l.b16 %v1533
    %v1574 = vunpack.c.l.b16 %v1534
    %v1575 = vunpack.c.l.b16 %v1535
    %v1576 = vunpack.c.l.b16 %v1536
    %v1577 = vunpack.c.l.b16 %v1537
    %v1578 = vunpack.c.l.b16 %v1538
    %v1579 = vunpack.c.l.b16 %v1539
    %v1580 = vunpack.c.l.b16 %v1540
    %v1581 = vunpack.c.l.b16 %v1541
    %v1582 = vunpack.c.l.b16 %v1542
    %v1583 = vunpack.c.l.b16 %v1543
    %v1584 = vunpack.c.l.b16 %v1544
    %v1585 = vunpack.c.l.b16 %v1545
    %v1586 = vunpack.c.l.b16 %v1546
    %v1587 = vunpack.c.l.b16 %v1547
    %v1588 = vunpack.c.l.b16 %v1548
    %v1589 = vpack.c.b16 %v1574, %v1573
    %v1590 = vpack.c.b16 %v1576, %v1575
    %v1591 = vpack.c.b16 %v1578, %v1577
    %v1592 = vpack.c.b16 %v1580, %v1579
    %v1593 = vpack.c.b16 %v1582, %v1581
    %v1594 = vpack.c.b16 %v1584, %v1583
    %v1595 = vpack.c.b16 %v1586, %v1585
    %v1596 = vpack.c.b16 %v1588, %v1587
    %1605 = vmatprep.subr.bf16.mxu0 0
    %1606 = vmatpush1.bf16.msra.mxu0 %v1589
    %1607 = vmatprep.subr.bf16.mxu0 0
    %1608 = vmatpush1.bf16.msra.mxu0 %v1590
    %1609 = vmatprep.subr.bf16.mxu0 0
    %1610 = vmatpush1.bf16.msra.mxu0 %v1591
    %1611 = vmatprep.subr.bf16.mxu0 0
    %1612 = vmatpush1.bf16.msra.mxu0 %v1592
    %1613 = vmatprep.subr.bf16.mxu0 0
    %1614 = vmatpush1.bf16.msra.mxu0 %v1593
    %1615 = vmatprep.subr.bf16.mxu0 0
    %1616 = vmatpush1.bf16.msra.mxu0 %v1594
    %1617 = vmatprep.subr.bf16.mxu0 0
    %1618 = vmatpush1.bf16.msra.mxu0 %v1595
    %1619 = vmatprep.subr.bf16.mxu0 0
    %1620 = vmatpush1.bf16.msra.mxu0 %v1596
    %1621 = vmatprep.subr.bf16.mxu0 0
    %1622 = vmatpush1.bf16.msra.mxu0 0
    %1623 = vmatprep.subr.bf16.mxu0 0
    %1624 = vmatpush1.bf16.msra.mxu0 0
    %1625 = vmatprep.subr.bf16.mxu0 0
    %1626 = vmatpush1.bf16.msra.mxu0 0
    %1627 = vmatprep.subr.bf16.mxu0 0
    %1628 = vmatpush1.bf16.msra.mxu0 0
    %1629 = vmatprep.subr.bf16.mxu0 0
    %1630 = vmatpush1.bf16.msra.mxu0 0
    %1631 = vmatprep.subr.bf16.mxu0 0
    %1632 = vmatpush1.bf16.msra.mxu0 0
    %1633 = vmatprep.subr.bf16.mxu0 0
    %1634 = vmatpush1.bf16.msra.mxu0 0
    %1635 = vmatprep.subr.bf16.mxu0 0
    %1636 = vmatpush1.bf16.msra.mxu0 0
    %1637 = vmatprep.mubr.bf16.mxu0 0
    %1638 = vmatmul.mubr.bf16.gmra.mrb[0].mxu0 %v1549
    %v1639 = vpop.f32.mrb[0].mxu0
    %v1640 = vadd.f32 %v1555, %v1639
    %v1641 = vpop.f32.mrb[0].mxu0
    %v1642 = vpop.f32.mrb[0].mxu0
    %v1643 = vpop.f32.mrb[0].mxu0
    %1644 = vdwg.mxu0
    %1645 = vst [vmem:[#allocation11] sm:$0xff] %v1640
    // Predicated region
    $region54: #{tpu_custom_call.1} parent=1 // pred_check
      _
    $region55: #{tpu_custom_call.1} parent=1 // pred_check_branch
      %1647 = sbr.rel (0) target = $region57
    $region56: #{tpu_custom_call.1} parent=1 // pred_region
      %s1649 = ssub.s32 128, 128
      %1650 = vsyncadd [#allocation4], %s1649
      %s1652 = sshll.u32 [#allocation11], 4
      %s1653 = int_to_ptr.vmem [resolvable:$true] %s1652
      %1655 = dma.vmem_to_hbm [thread:$0]  %s1653, 128, %s8, [#allocation4]
    $region57: #{tpu_custom_call.1} parent=1 // pred_fallthru
      _
    // Predicated region
    $region58: #{tpu_custom_call.1} parent=1 // pred_check
      _
    $region59: #{tpu_custom_call.1} parent=1 // pred_check_branch
      %1657 = sbr.rel (0) target = $region61
    $region60: #{tpu_custom_call.1} parent=1 // pred_region
      %1658 = dma.done [#allocation4], 128
    $region61: #{tpu_custom_call.1} parent=1 // pred_fallthru
      _
    %1659 = vsyncpa [#allocation3], 1
    %1660 = vsyncpa [#allocation6], 1
    %1661 = vsyncpa [#allocation9], 1
    %1662 = vsyncpa [#allocation4], 1

</llo_original>
